<compile_context>
chip_gen: v5e
topology: v5e:2x2
jax: 0.10.0
libtpu: 0.0.40
codegen_flags: <defaults>
</compile_context>

<pallas_src>
import functools
import math

import jax
import jax.numpy as jnp
from jax import lax
from jax.experimental import pallas as pl
from jax.experimental.pallas import tpu as pltpu


def _supports_bf16_transcendentals():
    """bf16 exp only pays off where the EUP handles bf16 natively (v6e / v7x)."""
    try:
        kind = jax.devices()[0].device_kind.lower()
    except Exception:
        return False
    return any(tag in kind for tag in ("v6", "v7", "7x"))


def _cos_mhsa_kernel(x_ref, wqkv_ref, wm_ref, bm_ref, lnw_ref, lnb_ref,
                     o_ref, qkv_ref, att_ref, *, n_head, ln_eps, bf16_exp):
    # x_ref block: (1, C, HW)  — full feature map of one batch element
    # o_ref block: (1, C, HW)  — lane-dense output block (HW multiple of 128)
    C = o_ref.shape[1]
    HW = o_ref.shape[2]
    d = C // n_head

    x = x_ref[0]                                       # (C, HW), channels on sublanes

    # Stacked q/k/v 1x1 convs: one (3C, C) @ (C, HW) matmul instead of three small ones.
    # Rows [0, C) = q, [C, 2C) = k, [2C, 3C) = v.  Computed ONCE per batch element.
    qkv_ref[...] = jnp.dot(wqkv_ref[...], x, preferred_element_type=jnp.float32)

    # Ones row used to fuse the softmax denominator into the AV matmul. Built in f32 so
    # the sublane concat is tile-aligned (v_h fills exactly one 8-sublane tile).
    ones_row = jnp.ones((1, HW), jnp.float32)

    def head_body(h, carry):
        # Heads are aligned d-row sublane slices of the qkv scratch.
        oq = pl.multiple_of(h * d, d)
        ok = pl.multiple_of(C + h * d, d)
        ov = pl.multiple_of(2 * C + h * d, d)
        qh = qkv_ref[pl.ds(oq, d), :]                  # (d, HW) f32
        kh = qkv_ref[pl.ds(ok, d), :]                  # (d, HW) f32
        vh = qkv_ref[pl.ds(ov, d), :]                  # (d, HW) f32

        # L2-normalize each token's head vector (reduce over d sublanes).
        # TODO(synk): rsqrt(sum + 1e-12) approximates F.normalize's clamp(norm, min=eps).
        q_inv = lax.rsqrt(jnp.sum(qh * qh, axis=0, keepdims=True) + 1e-12)   # (1, HW)
        k_inv = lax.rsqrt(jnp.sum(kh * kh, axis=0, keepdims=True) + 1e-12)   # (1, HW)
        qn = (qh * q_inv).astype(jnp.bfloat16)         # (d, HW)
        kn = (kh * k_inv).astype(jnp.bfloat16)         # (d, HW)

        # Cosine scores: contract the head dim (dim 0 of BOTH operands) so the MXU
        # consumes the (d, HW) tiles directly — no materialized transpose.
        s = lax.dot_general(qn, kn, (((0,), (0,)), ((), ())),
                            preferred_element_type=jnp.float32)             # (HWq, HWk)

        # Scores are bounded in [-1, 1] after L2 normalization -> no max-subtraction.
        if bf16_exp:
            p = jnp.exp(s.astype(jnp.bfloat16))        # bf16 EUP path (v6e / v7x)
        else:
            p = jnp.exp(s).astype(jnp.bfloat16)        # f32 EUP (v5e has no bf16 EUP/VPU)

        # Deferred softmax normalization with the denominator fused into the AV matmul:
        # append a ones row to v_h, so row d of the result is sum_k p[t, k].
        v_ext = jnp.concatenate([vh, ones_row], axis=0).astype(jnp.bfloat16)  # (d+1, HW)
        o_ext = lax.dot_general(v_ext, p, (((1,), (1,)), ((), ())),
                                preferred_element_type=jnp.float32)           # (d+1, HWq)
        denom = o_ext[d:d + 1, :]                                             # (1, HWq)
        oh = o_ext[:d, :] * pl.reciprocal(denom, approx=True)                 # (d, HWq)
        att_ref[pl.ds(oq, d), :] = oh                  # aligned sublane write
        return carry

    # fori_loop bounds each head's live range (the (HW, HW) score/prob temporaries of
    # different heads never overlap in vregs -> no cross-head spill pressure).
    lax.fori_loop(0, n_head, head_body, 0)

    # linear_merge (1x1 conv with bias) over all heads at once, then residual.
    merged = jnp.dot(wm_ref[...], att_ref[...],
                     preferred_element_type=jnp.float32) + bm_ref[...]        # (C, HW)
    y = x + merged

    # Channel-wise LayerNorm: mean/std over channels (torch.std is unbiased, ddof=1).
    # Exact divide here; approximate reciprocal is used only for the softmax.
    mean = jnp.mean(y, axis=0, keepdims=True)                                 # (1, HW)
    centered = y - mean
    var = jnp.sum(centered * centered, axis=0, keepdims=True) / jnp.float32(C - 1)
    std = jnp.sqrt(var)
    normed = centered / (std + ln_eps)
    o_ref[0] = (lnw_ref[...] * normed + lnb_ref[...]).astype(o_ref.dtype)


def cos_mhsa_forward(x_nchw, params, *, n_head, ln_eps=1e-6, bf16_exp=None):
    """x_nchw: [B, C, H, W] float32. Returns [B, C, H, W]."""
    B, C, H, W = x_nchw.shape
    HW = H * W
    assert C % n_head == 0

    if bf16_exp is None:
        bf16_exp = _supports_bf16_transcendentals()

    # NCHW -> [B, C, HW]: pure reshape, no transpose on either side of the kernel.
    x_seq = x_nchw.reshape(B, C, HW)

    # Conv2d weight [C_out, C_in, 1, 1] -> [C_out, C_in]; stack q/k/v into one matrix.
    wq = params["wq"][:, :, 0, 0]
    wk = params["wk"][:, :, 0, 0]
    wv = params["wv"][:, :, 0, 0]
    wqkv = jnp.concatenate([wq, wk, wv], axis=0)        # (3C, C)
    wm = params["wm"][:, :, 0, 0]
    bm = params["bm"].reshape(C, 1)
    lnw = params["ln_w"].reshape(C, 1)
    lnb = params["ln_b"].reshape(C, 1)

    kernel = functools.partial(_cos_mhsa_kernel, n_head=n_head, ln_eps=ln_eps,
                               bf16_exp=bool(bf16_exp))

    out_seq = pl.pallas_call(
        kernel,
        out_shape=jax.ShapeDtypeStruct((B, C, HW), x_seq.dtype),
        grid_spec=pltpu.PrefetchScalarGridSpec(
            num_scalar_prefetch=0,
            grid=(B,),
            in_specs=[
                pl.BlockSpec((1, C, HW), lambda b: (b, 0, 0)),   # x (full map per batch)
                pl.BlockSpec((3 * C, C), lambda b: (0, 0)),      # stacked Wq/Wk/Wv
                pl.BlockSpec((C, C), lambda b: (0, 0)),          # merge weight
                pl.BlockSpec((C, 1), lambda b: (0, 0)),          # merge bias
                pl.BlockSpec((C, 1), lambda b: (0, 0)),          # LN weight
                pl.BlockSpec((C, 1), lambda b: (0, 0)),          # LN bias
            ],
            out_specs=pl.BlockSpec((1, C, HW), lambda b: (b, 0, 0)),
            scratch_shapes=[
                pltpu.VMEM((3 * C, HW), jnp.float32),            # q/k/v projections
                pltpu.VMEM((C, HW), jnp.float32),                # per-head attention out
            ],
        ),
        compiler_params=pltpu.CompilerParams(
            # batch steps are independent; balances the 2 TensorCores on v7x when B >= 2
            dimension_semantics=("parallel",),
        ),
    )(x_seq, wqkv, wm, bm, lnw, lnb)

    return out_seq.reshape(B, C, H, W)


def init_params(key, external_dim):
    """Deterministic parameter init matching the module's shapes."""
    C = external_dim
    ks = jax.random.split(key, 5)
    fan_in = C  # 1x1 conv: fan_in = C_in * 1 * 1
    bound = 1.0 / math.sqrt(fan_in)

    def conv_w(k):
        return jax.random.uniform(k, (C, C, 1, 1), jnp.float32, -bound, bound)

    return {
        "wq": conv_w(ks[0]),
        "wk": conv_w(ks[1]),
        "wv": conv_w(ks[2]),
        "wm": conv_w(ks[3]),
        "bm": jax.random.uniform(ks[4], (C,), jnp.float32, -bound, bound),
        "ln_w": jnp.ones((C,), jnp.float32),   # LayerNorm weight = ones(size,1,1)
        "ln_b": jnp.zeros((C,), jnp.float32),  # LayerNorm bias   = zeros(size,1,1)
    }


if __name__ == "__main__":
    # Shapes consistent with the module: batch=2, external_dim=32, n_head=4, size=16.
    B, C, H, W = 2, 32, 16, 16
    n_head = 4

    key = jax.random.PRNGKey(0)
    k_x, k_p = jax.random.split(key)
    x = jax.random.normal(k_x, (B, C, H, W), jnp.float32)
    params = init_params(k_p, C)

    out = cos_mhsa_forward(x, params, n_head=n_head)
    out = jax.block_until_ready(out)

    assert out.shape == (B, C, H, W)
    assert bool(jnp.all(jnp.isfinite(out)))
    print("KERNEL_OK")
</pallas_src>

<mosaic_0001>
module attributes {stable_mosaic.version = 11 : i64} {
  func.func @_cos_mhsa_kernel(%arg0: i32, %arg1: memref<1x32x256xf32, #tpu.memory_space<vmem>>, %arg2: memref<96x32xf32, #tpu.memory_space<vmem>>, %arg3: memref<32x32xf32, #tpu.memory_space<vmem>>, %arg4: memref<32x1xf32, #tpu.memory_space<vmem>>, %arg5: memref<32x1xf32, #tpu.memory_space<vmem>>, %arg6: memref<32x1xf32, #tpu.memory_space<vmem>>, %arg7: memref<1x32x256xf32, #tpu.memory_space<vmem>>, %arg8: memref<96x256xf32, #tpu.memory_space<vmem>>, %arg9: memref<32x256xf32, #tpu.memory_space<vmem>>) attributes {dimension_semantics = [#tpu.dimension_semantics<parallel>], iteration_bounds = array<i64: 2>, scalar_prefetch = 0 : i64, scratch_operands = 2 : i64, tpu.core_type = #tpu.core_type<tc>, window_params = [{transform_indices = @transform_0, window_bounds = array<i64: 1, 32, 256>}, {pipeline_mode = #tpu.pipeline_mode<synchronous>, transform_indices = @transform_1, window_bounds = array<i64: 96, 32>}, {pipeline_mode = #tpu.pipeline_mode<synchronous>, transform_indices = @transform_2, window_bounds = array<i64: 32, 32>}, {pipeline_mode = #tpu.pipeline_mode<synchronous>, transform_indices = @transform_3, window_bounds = array<i64: 32, 1>}, {pipeline_mode = #tpu.pipeline_mode<synchronous>, transform_indices = @transform_4, window_bounds = array<i64: 32, 1>}, {pipeline_mode = #tpu.pipeline_mode<synchronous>, transform_indices = @transform_5, window_bounds = array<i64: 32, 1>}, {transform_indices = @transform_6, window_bounds = array<i64: 1, 32, 256>}]} {
    %c0 = arith.constant 0 : index
    %c0_0 = arith.constant 0 : index
    %c0_1 = arith.constant 0 : index
    %0 = vector.load %arg1[%c0, %c0_0, %c0_1] : memref<1x32x256xf32, #tpu.memory_space<vmem>>, vector<1x32x256xf32>
    %1 = vector.shape_cast %0 : vector<1x32x256xf32> to vector<32x256xf32>
    %c0_2 = arith.constant 0 : index
    %c0_3 = arith.constant 0 : index
    %2 = vector.load %arg2[%c0_2, %c0_3] : memref<96x32xf32, #tpu.memory_space<vmem>>, vector<96x32xf32>
    %cst = arith.constant dense<0.000000e+00> : vector<96x256xf32>
    %3 = tpu.matmul %2, %1, %cst {dimension_numbers = #tpu.dot_dimension_numbers<[1], [0], [0], [1], [0, 0, 1, 1], [], []>} : vector<96x32xf32>, vector<32x256xf32>, vector<96x256xf32> -> vector<96x256xf32>
    %c0_4 = arith.constant 0 : index
    %c0_5 = arith.constant 0 : index
    %4 = vector.load %arg8[%c0_4, %c0_5] : memref<96x256xf32, #tpu.memory_space<vmem>>, vector<96x256xf32>
    tpu.vector_store %arg8[%c0_4, %c0_5], %3 {strides = array<i32>} : memref<96x256xf32, #tpu.memory_space<vmem>>, vector<96x256xf32>,
    %cst_6 = arith.constant 1.000000e+00 : f32
    %5 = vector.broadcast %cst_6 : f32 to vector<1x256xf32>
    %c0_i32 = arith.constant 0 : i32
    %c4_i32 = arith.constant 4 : i32
    %6 = arith.addi %c0_i32, %c4_i32 : i32
    %c1_i32 = arith.constant 1 : i32
    scf.for %arg10 = %c0_i32 to %6 step %c1_i32  : i32 {
      %c8_i32 = arith.constant 8 : i32
      %39 = arith.muli %arg10, %c8_i32 : i32
      %40 = tpu.assume_multiple %39, 8 : i32
      %c8_i32_27 = arith.constant 8 : i32
      %41 = arith.muli %arg10, %c8_i32_27 : i32
      %c32_i32 = arith.constant 32 : i32
      %42 = arith.addi %c32_i32, %41 : i32
      %43 = tpu.assume_multiple %42, 8 : i32
      %c8_i32_28 = arith.constant 8 : i32
      %44 = arith.muli %arg10, %c8_i32_28 : i32
      %c64_i32 = arith.constant 64 : i32
      %45 = arith.addi %c64_i32, %44 : i32
      %46 = tpu.assume_multiple %45, 8 : i32
      %47 = arith.index_cast %40 : i32 to index
      %c0_29 = arith.constant 0 : index
      %48 = vector.load %arg8[%47, %c0_29] : memref<96x256xf32, #tpu.memory_space<vmem>>, vector<8x256xf32>
      %49 = arith.index_cast %43 : i32 to index
      %c0_30 = arith.constant 0 : index
      %50 = vector.load %arg8[%49, %c0_30] : memref<96x256xf32, #tpu.memory_space<vmem>>, vector<8x256xf32>
      %51 = arith.index_cast %46 : i32 to index
      %c0_31 = arith.constant 0 : index
      %52 = vector.load %arg8[%51, %c0_31] : memref<96x256xf32, #tpu.memory_space<vmem>>, vector<8x256xf32>
      %53 = arith.mulf %48, %48 : vector<8x256xf32>
      %cst_32 = arith.constant dense<0.000000e+00> : vector<256xf32>
      %54 = vector.multi_reduction <add>, %53, %cst_32 [0] : vector<8x256xf32> to vector<256xf32>
      %55 = vector.shape_cast %54 : vector<256xf32> to vector<1x256xf32>
      %cst_33 = arith.constant 9.99999996E-13 : f32
      %56 = vector.broadcast %cst_33 : f32 to vector<1x256xf32>
      %57 = arith.addf %55, %56 : vector<1x256xf32>
      %58 = math.rsqrt %57 : vector<1x256xf32>
      %59 = arith.mulf %50, %50 : vector<8x256xf32>
      %cst_34 = arith.constant dense<0.000000e+00> : vector<256xf32>
      %60 = vector.multi_reduction <add>, %59, %cst_34 [0] : vector<8x256xf32> to vector<256xf32>
      %61 = vector.shape_cast %60 : vector<256xf32> to vector<1x256xf32>
      %cst_35 = arith.constant 9.99999996E-13 : f32
      %62 = vector.broadcast %cst_35 : f32 to vector<1x256xf32>
      %63 = arith.addf %61, %62 : vector<1x256xf32>
      %64 = math.rsqrt %63 : vector<1x256xf32>
      %65 = vector.broadcast %58 : vector<1x256xf32> to vector<8x256xf32>
      %66 = arith.mulf %48, %65 : vector<8x256xf32>
      %67 = arith.truncf %66 : vector<8x256xf32> to vector<8x256xbf16>
      %68 = vector.broadcast %64 : vector<1x256xf32> to vector<8x256xf32>
      %69 = arith.mulf %50, %68 : vector<8x256xf32>
      %70 = arith.truncf %69 : vector<8x256xf32> to vector<8x256xbf16>
      %cst_36 = arith.constant dense<0.000000e+00> : vector<256x256xf32>
      %71 = tpu.matmul %67, %70, %cst_36 {dimension_numbers = #tpu.dot_dimension_numbers<[0], [0], [1], [1], [0, 1, 1, 1], [], []>} : vector<8x256xbf16>, vector<8x256xbf16>, vector<256x256xf32> -> vector<256x256xf32>
      %72 = math.exp %71 : vector<256x256xf32>
      %73 = arith.truncf %72 : vector<256x256xf32> to vector<256x256xbf16>
      %74 = tpu.concatenate %52, %5 in 0 : vector<8x256xf32>, vector<1x256xf32> -> vector<9x256xf32>
      %75 = arith.truncf %74 : vector<9x256xf32> to vector<9x256xbf16>
      %cst_37 = arith.constant dense<0.000000e+00> : vector<9x256xf32>
      %76 = tpu.matmul %75, %73, %cst_37 {dimension_numbers = #tpu.dot_dimension_numbers<[1], [1], [0], [0], [0, 0, 1, 0], [], []>} : vector<9x256xbf16>, vector<256x256xbf16>, vector<9x256xf32> -> vector<9x256xf32>
      %77 = vector.extract_strided_slice %76 {offsets = [8, 0], sizes = [1, 256], strides = [1, 1]} : vector<9x256xf32> to vector<1x256xf32>
      %78 = vector.extract_strided_slice %76 {offsets = [0, 0], sizes = [8, 256], strides = [1, 1]} : vector<9x256xf32> to vector<8x256xf32>
      %79 = tpu.reciprocal %77 {approx = true} : vector<1x256xf32> -> vector<1x256xf32>
      %80 = vector.broadcast %79 : vector<1x256xf32> to vector<8x256xf32>
      %81 = arith.mulf %78, %80 : vector<8x256xf32>
      %82 = arith.index_cast %40 : i32 to index
      %c0_38 = arith.constant 0 : index
      %83 = vector.load %arg9[%82, %c0_38] : memref<32x256xf32, #tpu.memory_space<vmem>>, vector<8x256xf32>
      tpu.vector_store %arg9[%82, %c0_38], %81 {strides = array<i32>} : memref<32x256xf32, #tpu.memory_space<vmem>>, vector<8x256xf32>,
    }
    %c4_i32_7 = arith.constant 4 : i32
    %c0_8 = arith.constant 0 : index
    %c0_9 = arith.constant 0 : index
    %7 = vector.load %arg3[%c0_8, %c0_9] : memref<32x32xf32, #tpu.memory_space<vmem>>, vector<32x32xf32>
    %c0_10 = arith.constant 0 : index
    %c0_11 = arith.constant 0 : index
    %8 = vector.load %arg9[%c0_10, %c0_11] : memref<32x256xf32, #tpu.memory_space<vmem>>, vector<32x256xf32>
    %cst_12 = arith.constant dense<0.000000e+00> : vector<32x256xf32>
    %9 = tpu.matmul %7, %8, %cst_12 {dimension_numbers = #tpu.dot_dimension_numbers<[1], [0], [0], [1], [0, 0, 1, 1], [], []>} : vector<32x32xf32>, vector<32x256xf32>, vector<32x256xf32> -> vector<32x256xf32>
    %c0_13 = arith.constant 0 : index
    %c0_14 = arith.constant 0 : index
    %10 = vector.load %arg4[%c0_13, %c0_14] : memref<32x1xf32, #tpu.memory_space<vmem>>, vector<32x1xf32>
    %11 = vector.broadcast %10 : vector<32x1xf32> to vector<32x256xf32>
    %12 = arith.addf %9, %11 : vector<32x256xf32>
    %13 = arith.addf %1, %12 : vector<32x256xf32>
    %cst_15 = arith.constant dense<0.000000e+00> : vector<256xf32>
    %14 = vector.multi_reduction <add>, %13, %cst_15 [0] : vector<32x256xf32> to vector<256xf32>
    %15 = vector.shape_cast %14 : vector<256xf32> to vector<1x256xf32>
    %cst_16 = arith.constant 3.200000e+01 : f32
    %16 = vector.broadcast %cst_16 : f32 to vector<1x256xf32>
    %17 = arith.divf %15, %16 : vector<1x256xf32>
    %18 = vector.broadcast %17 : vector<1x256xf32> to vector<32x256xf32>
    %19 = arith.subf %13, %18 : vector<32x256xf32>
    %20 = arith.mulf %19, %19 : vector<32x256xf32>
    %cst_17 = arith.constant dense<0.000000e+00> : vector<256xf32>
    %21 = vector.multi_reduction <add>, %20, %cst_17 [0] : vector<32x256xf32> to vector<256xf32>
    %22 = vector.shape_cast %21 : vector<256xf32> to vector<1x256xf32>
    %cst_18 = arith.constant 3.100000e+01 : f32
    %23 = vector.broadcast %cst_18 : f32 to vector<1x256xf32>
    %24 = arith.divf %22, %23 : vector<1x256xf32>
    %25 = math.sqrt %24 : vector<1x256xf32>
    %cst_19 = arith.constant 9.99999997E-7 : f32
    %26 = vector.broadcast %cst_19 : f32 to vector<1x256xf32>
    %27 = arith.addf %25, %26 : vector<1x256xf32>
    %28 = vector.broadcast %27 : vector<1x256xf32> to vector<32x256xf32>
    %29 = arith.divf %19, %28 : vector<32x256xf32>
    %c0_20 = arith.constant 0 : index
    %c0_21 = arith.constant 0 : index
    %30 = vector.load %arg5[%c0_20, %c0_21] : memref<32x1xf32, #tpu.memory_space<vmem>>, vector<32x1xf32>
    %31 = vector.broadcast %30 : vector<32x1xf32> to vector<32x256xf32>
    %32 = arith.mulf %31, %29 : vector<32x256xf32>
    %c0_22 = arith.constant 0 : index
    %c0_23 = arith.constant 0 : index
    %33 = vector.load %arg6[%c0_22, %c0_23] : memref<32x1xf32, #tpu.memory_space<vmem>>, vector<32x1xf32>
    %34 = vector.broadcast %33 : vector<32x1xf32> to vector<32x256xf32>
    %35 = arith.addf %32, %34 : vector<32x256xf32>
    %c0_24 = arith.constant 0 : index
    %c0_25 = arith.constant 0 : index
    %c0_26 = arith.constant 0 : index
    %36 = vector.load %arg7[%c0_24, %c0_25, %c0_26] : memref<1x32x256xf32, #tpu.memory_space<vmem>>, vector<1x32x256xf32>
    %37 = vector.shape_cast %36 : vector<1x32x256xf32> to vector<32x256xf32>
    %38 = vector.shape_cast %35 : vector<32x256xf32> to vector<1x32x256xf32>
    tpu.vector_store %arg7[%c0_24, %c0_25, %c0_26], %38 {strides = array<i32>} : memref<1x32x256xf32, #tpu.memory_space<vmem>>, vector<1x32x256xf32>,
    return
  }
  func.func @transform_0(%arg0: i32) -> (i32, i32, i32) {
    %c0_i32 = arith.constant 0 : i32
    %c0_i32_0 = arith.constant 0 : i32
    %c0_i32_1 = arith.constant 0 : i32
    return %arg0, %c0_i32, %c0_i32_0 : i32, i32, i32
  }
  func.func @transform_1(%arg0: i32) -> (i32, i32) {
    %c0_i32 = arith.constant 0 : i32
    %c0_i32_0 = arith.constant 0 : i32
    %c0_i32_1 = arith.constant 0 : i32
    return %c0_i32, %c0_i32_0 : i32, i32
  }
  func.func @transform_2(%arg0: i32) -> (i32, i32) {
    %c0_i32 = arith.constant 0 : i32
    %c0_i32_0 = arith.constant 0 : i32
    %c0_i32_1 = arith.constant 0 : i32
    return %c0_i32, %c0_i32_0 : i32, i32
  }
  func.func @transform_3(%arg0: i32) -> (i32, i32) {
    %c0_i32 = arith.constant 0 : i32
    %c0_i32_0 = arith.constant 0 : i32
    %c0_i32_1 = arith.constant 0 : i32
    return %c0_i32, %c0_i32_0 : i32, i32
  }
  func.func @transform_4(%arg0: i32) -> (i32, i32) {
    %c0_i32 = arith.constant 0 : i32
    %c0_i32_0 = arith.constant 0 : i32
    %c0_i32_1 = arith.constant 0 : i32
    return %c0_i32, %c0_i32_0 : i32, i32
  }
  func.func @transform_5(%arg0: i32) -> (i32, i32) {
    %c0_i32 = arith.constant 0 : i32
    %c0_i32_0 = arith.constant 0 : i32
    %c0_i32_1 = arith.constant 0 : i32
    return %c0_i32, %c0_i32_0 : i32, i32
  }
  func.func @transform_6(%arg0: i32) -> (i32, i32, i32) {
    %c0_i32 = arith.constant 0 : i32
    %c0_i32_0 = arith.constant 0 : i32
    %c0_i32_1 = arith.constant 0 : i32
    return %arg0, %c0_i32, %c0_i32_0 : i32, i32, i32
  }
}

</mosaic_0001>

<llo_original>
// kernel: tpu_custom_call.1
$region0: #{tpu_custom_call.1}
  #allocation0 [shape = 'u32[]', space=smem, size = 0x4, offset = 0x4, fixed_abs, tag = 'smem constant byte address 0x4 - core index']
  #allocation1 [shape = 'u32[72,128]{1,0:T(1,128)}', space=vmem, size = 0x9000, scoped, tag = 'internal scratch']
  #allocation2 [shape = 'f32[96,256]{1,0:T(8,128)}', space=vmem, size = 0x18000, scoped, tag = 'scratch operand']
  #allocation3 [shape = 'f32[32,256]{1,0:T(8,128)}', space=vmem, size = 0x8000, scoped, tag = 'scratch operand']
  %s0 = inlined_call_operand.vmem [shape: f32[2,32,256], index: 0, kind: input, shape index: {}]
  %s1 = inlined_call_operand.vmem [shape: f32[96,32], index: 1, kind: input, shape index: {}]
  %s2 = inlined_call_operand.vmem [shape: f32[32,32], index: 2, kind: input, shape index: {}]
  %s3 = inlined_call_operand.vmem [shape: f32[32,1], index: 3, kind: input, shape index: {}]
  %s4 = inlined_call_operand.vmem [shape: f32[32,1], index: 4, kind: input, shape index: {}]
  %s5 = inlined_call_operand.vmem [shape: f32[32,1], index: 5, kind: input, shape index: {}]
  %s6 = inlined_call_operand.hbm [shape: f32[2,32,256], index: 6, kind: output, shape index: {}]
  %s7 = sld [smem:[#allocation0]]
  $region64: #{tpu_custom_call.1} parent=0
    _
  %s9 = ssub.s32 1, %s7
  %s10 = scalar_select 0, %s9, %s7
  $region1: #{tpu_custom_call.1} parent=0
    #allocation4 [shape = 'u8[65536]{0}', space=vmem, size = 0x10000, scoped, tag = 'output window, operand 0']
    #allocation5 [shape = 's32[2]{0}', space=sflag, size = 0x8, scoped, tag = 'scoped memory for tpu_custom_call.1']
    %11 = vsyncpa [#allocation5], 0
    %s12 = scalar_lea.sflag [#allocation5], 1
    %13 = vsyncpa %s12, 0
    loop: start=0, step=1, limit=4
    $region2: #{tpu_custom_call.1} parent=1 // loop_pre_header
      _
    $region3: #{tpu_custom_call.1} parent=1 // loop_header
      %s15 = sphi 0, %s19
      %p16 = scmp.ge.s32.totalorder %s15, 4
      %s25 = sphi 0, %s27
      %s28 = sphi 0, %s25
      %s29 = sphi 0, %s28
      %s45 = sphi 0, %s29
      %s49 = sphi 0, %s49
      %s51 = sphi 0, %s49
      %s52 = sphi 0, %s51
      %s66 = sphi 0, %s52
      %s70 = sphi 0, %s70
      %s72 = sphi 0, %s70
      %s73 = sphi 0, %s72
      %s87 = sphi 0, %s73
      %s91 = sphi 0, %s91
      %s93 = sphi 0, %s91
      %s94 = sphi 0, %s93
      %s108 = sphi 0, %s94
      %s112 = sphi 0, %s112
      %s114 = sphi 0, %s112
      %s115 = sphi 0, %s114
      %s129 = sphi 0, %s115
      %s133 = sphi 0, %s133
      %s135 = sphi 0, %s133
      %s136 = sphi 0, %s135
      %s150 = sphi 0, %s136
      %s156 = sphi 0, %s158
      %s159 = sphi 0, %s156
      %s160 = sphi 0, %s159
      %s176 = sphi 0, %s160
    $region4: #{tpu_custom_call.1} parent=1 // loop_header_branch
      %18 = sbr.rel (%p16) target = $region8
    $region5: #{tpu_custom_call.1} parent=1 // loop_body
      %s20 = ssub.s32 %s15, 1
      %s21 = ssub.s32 %s15, 2
      %s22 = sadd.s32 %s15, 1
      %s23 = ssub.s32 %s15, %s22
      %p24 = scmp.eq.s32.totalorder %s23, 0
      %s26 = sadd.s32 %s25, 1
      %s27 = scalar_select %p24, %s25, %s26
      %p30 = pneg %p24
      %p31 = scmp.eq.s32.totalorder %s15, 1
      %p32 = por %p30, %p31
      %p33 = scmp.ne.s32.totalorder %s25, %s28
      %p34 = scmp.eq.s32.totalorder %s15, 0
      %p35 = por %p33, %p34
      %p36 = scmp.ne.s32.totalorder %s25, %s28
      %p37 = scmp.eq.s32.totalorder %s20, 1
      %p38 = por %p36, %p37
      %p39 = scmp.ne.s32.totalorder %s28, %s29
      %p40 = scmp.eq.s32.totalorder %s20, 0
      %p41 = por %p39, %p40
      %p42 = scmp.ne.s32.totalorder %s28, %s29
      %p43 = scmp.eq.s32.totalorder %s21, 1
      %p44 = por %p42, %p43
      %p46 = scmp.ne.s32.totalorder %s29, %s45
      %p47 = scmp.eq.s32.totalorder %s21, 0
      %p48 = por %p46, %p47
      %s50 = sadd.s32 %s49, 1
      %p53 = scmp.eq.s32.totalorder %s15, 1
      %p54 = scmp.ne.s32.totalorder %s49, %s51
      %p55 = scmp.eq.s32.totalorder %s15, 0
      %p56 = por %p54, %p55
      %p57 = scmp.ne.s32.totalorder %s49, %s51
      %p58 = scmp.eq.s32.totalorder %s20, 1
      %p59 = por %p57, %p58
      %p60 = scmp.ne.s32.totalorder %s51, %s52
      %p61 = scmp.eq.s32.totalorder %s20, 0
      %p62 = por %p60, %p61
      %p63 = scmp.ne.s32.totalorder %s51, %s52
      %p64 = scmp.eq.s32.totalorder %s21, 1
      %p65 = por %p63, %p64
      %p67 = scmp.ne.s32.totalorder %s52, %s66
      %p68 = scmp.eq.s32.totalorder %s21, 0
      %p69 = por %p67, %p68
      %s71 = sadd.s32 %s70, 1
      %p74 = scmp.eq.s32.totalorder %s15, 1
      %p75 = scmp.ne.s32.totalorder %s70, %s72
      %p76 = scmp.eq.s32.totalorder %s15, 0
      %p77 = por %p75, %p76
      %p78 = scmp.ne.s32.totalorder %s70, %s72
      %p79 = scmp.eq.s32.totalorder %s20, 1
      %p80 = por %p78, %p79
      %p81 = scmp.ne.s32.totalorder %s72, %s73
      %p82 = scmp.eq.s32.totalorder %s20, 0
      %p83 = por %p81, %p82
      %p84 = scmp.ne.s32.totalorder %s72, %s73
      %p85 = scmp.eq.s32.totalorder %s21, 1
      %p86 = por %p84, %p85
      %p88 = scmp.ne.s32.totalorder %s73, %s87
      %p89 = scmp.eq.s32.totalorder %s21, 0
      %p90 = por %p88, %p89
      %s92 = sadd.s32 %s91, 1
      %p95 = scmp.eq.s32.totalorder %s15, 1
      %p96 = scmp.ne.s32.totalorder %s91, %s93
      %p97 = scmp.eq.s32.totalorder %s15, 0
      %p98 = por %p96, %p97
      %p99 = scmp.ne.s32.totalorder %s91, %s93
      %p100 = scmp.eq.s32.totalorder %s20, 1
      %p101 = por %p99, %p100
      %p102 = scmp.ne.s32.totalorder %s93, %s94
      %p103 = scmp.eq.s32.totalorder %s20, 0
      %p104 = por %p102, %p103
      %p105 = scmp.ne.s32.totalorder %s93, %s94
      %p106 = scmp.eq.s32.totalorder %s21, 1
      %p107 = por %p105, %p106
      %p109 = scmp.ne.s32.totalorder %s94, %s108
      %p110 = scmp.eq.s32.totalorder %s21, 0
      %p111 = por %p109, %p110
      %s113 = sadd.s32 %s112, 1
      %p116 = scmp.eq.s32.totalorder %s15, 1
      %p117 = scmp.ne.s32.totalorder %s112, %s114
      %p118 = scmp.eq.s32.totalorder %s15, 0
      %p119 = por %p117, %p118
      %p120 = scmp.ne.s32.totalorder %s112, %s114
      %p121 = scmp.eq.s32.totalorder %s20, 1
      %p122 = por %p120, %p121
      %p123 = scmp.ne.s32.totalorder %s114, %s115
      %p124 = scmp.eq.s32.totalorder %s20, 0
      %p125 = por %p123, %p124
      %p126 = scmp.ne.s32.totalorder %s114, %s115
      %p127 = scmp.eq.s32.totalorder %s21, 1
      %p128 = por %p126, %p127
      %p130 = scmp.ne.s32.totalorder %s115, %s129
      %p131 = scmp.eq.s32.totalorder %s21, 0
      %p132 = por %p130, %p131
      %s134 = sadd.s32 %s133, 1
      %p137 = scmp.eq.s32.totalorder %s15, 1
      %p138 = scmp.ne.s32.totalorder %s133, %s135
      %p139 = scmp.eq.s32.totalorder %s15, 0
      %p140 = por %p138, %p139
      %p141 = scmp.ne.s32.totalorder %s133, %s135
      %p142 = scmp.eq.s32.totalorder %s20, 1
      %p143 = por %p141, %p142
      %p144 = scmp.ne.s32.totalorder %s135, %s136
      %p145 = scmp.eq.s32.totalorder %s20, 0
      %p146 = por %p144, %p145
      %p147 = scmp.ne.s32.totalorder %s135, %s136
      %p148 = scmp.eq.s32.totalorder %s21, 1
      %p149 = por %p147, %p148
      %p151 = scmp.ne.s32.totalorder %s136, %s150
      %p152 = scmp.eq.s32.totalorder %s21, 0
      %p153 = por %p151, %p152
      %s154 = ssub.s32 %s15, %s22
      %p155 = scmp.eq.s32.totalorder %s154, 0
      %s157 = sadd.s32 %s156, 1
      %s158 = scalar_select %p155, %s156, %s157
      %p161 = pneg %p155
      %p162 = scmp.eq.s32.totalorder %s15, 1
      %p163 = por %p161, %p162
      %p164 = scmp.ne.s32.totalorder %s156, %s159
      %p165 = scmp.eq.s32.totalorder %s15, 0
      %p166 = por %p164, %p165
      %p167 = scmp.ne.s32.totalorder %s156, %s159
      %p168 = scmp.eq.s32.totalorder %s20, 1
      %p169 = por %p167, %p168
      %p170 = scmp.ne.s32.totalorder %s159, %s160
      %p171 = scmp.eq.s32.totalorder %s20, 0
      %p172 = por %p170, %p171
      %p173 = scmp.ne.s32.totalorder %s159, %s160
      %p174 = scmp.eq.s32.totalorder %s21, 1
      %p175 = por %p173, %p174
      %p177 = scmp.ne.s32.totalorder %s160, %s176
      %p178 = scmp.eq.s32.totalorder %s21, 0
      %p179 = por %p177, %p178
      %p180 = scmp.le.s32.totalorder 1, %s15
      %p181 = scmp.lt.s32.totalorder %s15, 3
      %p182 = pnand %p180, %p181
      %p183 = pneg %p182
      // Predicated region
      $region9: #{tpu_custom_call.1} parent=5 // pred_check
        _
      $region10: #{tpu_custom_call.1} parent=5 // pred_check_branch
        %185 = sbr.rel (%p182) target = $region12
      $region11: #{tpu_custom_call.1} parent=5 // pred_region
        %s186 = ssub.s32 %s15, 1
        // Predicated region
        $region13: #{tpu_custom_call.1} parent=11 // pred_check
          %p187 = pneg %p62
        $region14: #{tpu_custom_call.1} parent=11 // pred_check_branch
          %189 = sbr.rel (%p187) target = $region16
        $region15: #{tpu_custom_call.1} parent=11 // pred_region
          _
        $region16: #{tpu_custom_call.1} parent=11 // pred_fallthru
          _
        // Predicated region
        $region17: #{tpu_custom_call.1} parent=11 // pred_check
          %p190 = pneg %p83
        $region18: #{tpu_custom_call.1} parent=11 // pred_check_branch
          %192 = sbr.rel (%p190) target = $region20
        $region19: #{tpu_custom_call.1} parent=11 // pred_region
          _
        $region20: #{tpu_custom_call.1} parent=11 // pred_fallthru
          _
        // Predicated region
        $region21: #{tpu_custom_call.1} parent=11 // pred_check
          %p193 = pneg %p104
        $region22: #{tpu_custom_call.1} parent=11 // pred_check_branch
          %195 = sbr.rel (%p193) target = $region24
        $region23: #{tpu_custom_call.1} parent=11 // pred_region
          _
        $region24: #{tpu_custom_call.1} parent=11 // pred_fallthru
          _
        // Predicated region
        $region25: #{tpu_custom_call.1} parent=11 // pred_check
          %p196 = pneg %p125
        $region26: #{tpu_custom_call.1} parent=11 // pred_check_branch
          %198 = sbr.rel (%p196) target = $region28
        $region27: #{tpu_custom_call.1} parent=11 // pred_region
          _
        $region28: #{tpu_custom_call.1} parent=11 // pred_fallthru
          _
        // Predicated region
        $region29: #{tpu_custom_call.1} parent=11 // pred_check
          %p199 = pneg %p146
        $region30: #{tpu_custom_call.1} parent=11 // pred_check_branch
          %201 = sbr.rel (%p199) target = $region32
        $region31: #{tpu_custom_call.1} parent=11 // pred_region
          _
        $region32: #{tpu_custom_call.1} parent=11 // pred_fallthru
          _
      $region12: #{tpu_custom_call.1} parent=5 // pred_fallthru
        _
      %p202 = scmp.lt.s32.totalorder %s15, 2
      // Predicated region
      $region33: #{tpu_custom_call.1} parent=5 // pred_check
        %p203 = pneg %p202
      $region34: #{tpu_custom_call.1} parent=5 // pred_check_branch
        %205 = sbr.rel (%p203) target = $region36
      $region35: #{tpu_custom_call.1} parent=5 // pred_region
        // Predicated region
        $region37: #{tpu_custom_call.1} parent=35 // pred_check
          %p206 = pneg %p35
        $region38: #{tpu_custom_call.1} parent=35 // pred_check_branch
          %208 = sbr.rel (%p206) target = $region40
        $region39: #{tpu_custom_call.1} parent=35 // pred_region
          %p209 = scmp.lt.s32.totalorder %s15, 1
          %s210 = scalar_select %p209, %s15, 1
          %s211 = smul.addr %s210, 8
          %s212 = smul.addr %s211, 8
          %s213 = scalar_lea.vmem %s0, %s212
        $region40: #{tpu_custom_call.1} parent=35 // pred_fallthru
          _
      $region36: #{tpu_custom_call.1} parent=5 // pred_fallthru
        _
      %p214 = scmp.le.s32.totalorder 1, %s15
      %p215 = scmp.lt.s32.totalorder %s15, 3
      %p216 = pnand %p214, %p215
      %p217 = pneg %p216
      // Predicated region
      $region41: #{tpu_custom_call.1} parent=5 // pred_check
        _
      $region42: #{tpu_custom_call.1} parent=5 // pred_check_branch
        %219 = sbr.rel (%p216) target = $region44
      $region43: #{tpu_custom_call.1} parent=5 // pred_region
        %s220 = ssub.s32 %s15, 1
        %p221 = scmp.lt.s32.totalorder %s20, 1
        %s222 = scalar_select %p221, %s20, 1
        %s223 = smul.addr %s222, 8
        %s224 = smul.addr %s223, 8
        %s225 = scalar_lea.vmem %s0, %s224
        %p226 = pneg %p41
        %p227 = pneg %p38
        %p228 = pneg %p62
        %p229 = pneg %p59
        %p230 = pneg %p83
        %p231 = pneg %p80
        %p232 = pneg %p104
        %p233 = pneg %p101
        %p234 = pneg %p125
        %p235 = pneg %p122
        %p236 = pneg %p146
        %p237 = pneg %p143
        %p238 = pneg %p172
        %p239 = pneg %p169
        %s240 = sand.u32 %s159, 1
        %s241 = scalar_lea.sflag [#allocation5], %s240
        %s242 = sand.u32 %s159, 1
        %s243 = smul.addr %s242, 64
        %s244 = scalar_lea.vmem [#allocation4], %s243
        %p245 = scmp.lt.s32.totalorder %s20, 1
        %s246 = scalar_select %p245, %s20, 1
        %s247 = smul.addr %s246, 8
        %s248 = smul.addr %s247, 8
        %s249 = scalar_lea.vmem %s0, %s248
        %v251 = vld [vmem:[%s249] sm:$0xff]
        %v252 = vld [vmem:[%s249 + $0x8] sm:$0xff]
        %v253 = vld [vmem:[%s249 + $0x10] sm:$0xff]
        %v254 = vld [vmem:[%s249 + $0x18] sm:$0xff]
        %v255 = vld [vmem:[%s249 + $0x20] sm:$0xff]
        %v256 = vld [vmem:[%s249 + $0x28] sm:$0xff]
        %v257 = vld [vmem:[%s249 + $0x30] sm:$0xff]
        %v258 = vld [vmem:[%s249 + $0x38] sm:$0xff]
        %v259 = vld [vmem:[%s1] sm:$0xff]
        %v260 = vld [vmem:[%s1 + $0x8] sm:$0xff]
        %v261 = vld [vmem:[%s1 + $0x10] sm:$0xff]
        %v262 = vld [vmem:[%s1 + $0x18] sm:$0xff]
        %v263 = vld [vmem:[%s1 + $0x20] sm:$0xff]
        %v264 = vld [vmem:[%s1 + $0x28] sm:$0xff]
        %v265 = vld [vmem:[%s1 + $0x30] sm:$0xff]
        %v266 = vld [vmem:[%s1 + $0x38] sm:$0xff]
        %v267 = vld [vmem:[%s1 + $0x40] sm:$0xff]
        %v268 = vld [vmem:[%s1 + $0x48] sm:$0xff]
        %v269 = vld [vmem:[%s1 + $0x50] sm:$0xff]
        %v270 = vld [vmem:[%s1 + $0x58] sm:$0xff]
        %vm271 = vcmask 261120
        %v273 = vsel %vm271, %v259, 0
        %v276 = vsel %vm271, %v260, 0
        %v279 = vsel %vm271, %v261, 0
        %v282 = vsel %vm271, %v262, 0
        %v285 = vsel %vm271, %v263, 0
        %v288 = vsel %vm271, %v264, 0
        %v291 = vsel %vm271, %v265, 0
        %v294 = vsel %vm271, %v266, 0
        %v297 = vsel %vm271, %v267, 0
        %v300 = vsel %vm271, %v268, 0
        %v303 = vsel %vm271, %v269, 0
        %v306 = vsel %vm271, %v270, 0
        %308 = vmatpush.msra.mxu0 0.0
        %309 = vmatpush.msra.mxu0 0.0
        %310 = vmatpush.msra.mxu0 0.0
        %311 = vmatpush.msra.mxu0 0.0
        %312 = vmatpush.msra.mxu0 0.0
        %313 = vmatpush.msra.mxu0 0.0
        %314 = vmatpush.msra.mxu0 0.0
        %315 = vmatpush.msra.mxu0 0.0
        %316 = vmatpush.msra.mxu0 0.0
        %317 = vmatpush.msra.mxu0 0.0
        %318 = vmatpush.msra.mxu0 0.0
        %319 = vmatpush.msra.mxu0 0.0
        %320 = vmatpush.msra.mxu0 %v257
        %321 = vmatpush.msra.mxu0 %v255
        %322 = vmatpush.msra.mxu0 %v253
        %323 = vmatpush.msra.mxu0 %v251
        %324 = vmatmul.f32.gmra.mxu0 %v273
        %v325 = vpop.f32.mrf.mxu0
        %v326 = vadd.f32 0.0, %v325
        %327 = vmatmul.f32.gmra.mxu0 %v276
        %v328 = vpop.f32.mrf.mxu0
        %v329 = vadd.f32 0.0, %v328
        %330 = vmatmul.f32.gmra.mxu0 %v279
        %v331 = vpop.f32.mrf.mxu0
        %v332 = vadd.f32 0.0, %v331
        %333 = vmatmul.f32.gmra.mxu0 %v282
        %v334 = vpop.f32.mrf.mxu0
        %v335 = vadd.f32 0.0, %v334
        %336 = vmatmul.f32.gmra.mxu0 %v285
        %v337 = vpop.f32.mrf.mxu0
        %v338 = vadd.f32 0.0, %v337
        %339 = vmatmul.f32.gmra.mxu0 %v288
        %v340 = vpop.f32.mrf.mxu0
        %v341 = vadd.f32 0.0, %v340
        %342 = vmatmul.f32.gmra.mxu0 %v291
        %v343 = vpop.f32.mrf.mxu0
        %v344 = vadd.f32 0.0, %v343
        %345 = vmatmul.f32.gmra.mxu0 %v294
        %v346 = vpop.f32.mrf.mxu0
        %v347 = vadd.f32 0.0, %v346
        %348 = vmatmul.f32.gmra.mxu0 %v297
        %v349 = vpop.f32.mrf.mxu0
        %v350 = vadd.f32 0.0, %v349
        %351 = vmatmul.f32.gmra.mxu0 %v300
        %v352 = vpop.f32.mrf.mxu0
        %v353 = vadd.f32 0.0, %v352
        %354 = vmatmul.f32.gmra.mxu0 %v303
        %v355 = vpop.f32.mrf.mxu0
        %v356 = vadd.f32 0.0, %v355
        %357 = vmatmul.f32.gmra.mxu0 %v306
        %v358 = vpop.f32.mrf.mxu0
        %v359 = vadd.f32 0.0, %v358
        %360 = vdwg.mxu0
        %361 = vmatpush.msra.mxu0 0.0
        %362 = vmatpush.msra.mxu0 0.0
        %363 = vmatpush.msra.mxu0 0.0
        %364 = vmatpush.msra.mxu0 0.0
        %365 = vmatpush.msra.mxu0 0.0
        %366 = vmatpush.msra.mxu0 0.0
        %367 = vmatpush.msra.mxu0 0.0
        %368 = vmatpush.msra.mxu0 0.0
        %369 = vmatpush.msra.mxu0 0.0
        %370 = vmatpush.msra.mxu0 0.0
        %371 = vmatpush.msra.mxu0 0.0
        %372 = vmatpush.msra.mxu0 0.0
        %373 = vmatpush.msra.mxu0 %v258
        %374 = vmatpush.msra.mxu0 %v256
        %375 = vmatpush.msra.mxu0 %v254
        %376 = vmatpush.msra.mxu0 %v252
        %377 = vmatmul.f32.gmra.mxu0 %v273
        %v378 = vpop.f32.mrf.mxu0
        %v379 = vadd.f32 0.0, %v378
        %380 = vmatmul.f32.gmra.mxu0 %v276
        %v381 = vpop.f32.mrf.mxu0
        %v382 = vadd.f32 0.0, %v381
        %383 = vmatmul.f32.gmra.mxu0 %v279
        %v384 = vpop.f32.mrf.mxu0
        %v385 = vadd.f32 0.0, %v384
        %386 = vmatmul.f32.gmra.mxu0 %v282
        %v387 = vpop.f32.mrf.mxu0
        %v388 = vadd.f32 0.0, %v387
        %389 = vmatmul.f32.gmra.mxu0 %v285
        %v390 = vpop.f32.mrf.mxu0
        %v391 = vadd.f32 0.0, %v390
        %392 = vmatmul.f32.gmra.mxu0 %v288
        %v393 = vpop.f32.mrf.mxu0
        %v394 = vadd.f32 0.0, %v393
        %395 = vmatmul.f32.gmra.mxu0 %v291
        %v396 = vpop.f32.mrf.mxu0
        %v397 = vadd.f32 0.0, %v396
        %398 = vmatmul.f32.gmra.mxu0 %v294
        %v399 = vpop.f32.mrf.mxu0
        %v400 = vadd.f32 0.0, %v399
        %401 = vmatmul.f32.gmra.mxu0 %v297
        %v402 = vpop.f32.mrf.mxu0
        %v403 = vadd.f32 0.0, %v402
        %404 = vmatmul.f32.gmra.mxu0 %v300
        %v405 = vpop.f32.mrf.mxu0
        %v406 = vadd.f32 0.0, %v405
        %407 = vmatmul.f32.gmra.mxu0 %v303
        %v408 = vpop.f32.mrf.mxu0
        %v409 = vadd.f32 0.0, %v408
        %410 = vmatmul.f32.gmra.mxu0 %v306
        %v411 = vpop.f32.mrf.mxu0
        %v412 = vadd.f32 0.0, %v411
        %413 = vdwg.mxu0
        %414 = vst [vmem:[#allocation2] sm:$0xff] %v326
        %415 = vst [vmem:[#allocation2 + $0x8] sm:$0xff] %v379
        %416 = vst [vmem:[#allocation2 + $0x10] sm:$0xff] %v329
        %417 = vst [vmem:[#allocation2 + $0x18] sm:$0xff] %v382
        %418 = vst [vmem:[#allocation2 + $0x20] sm:$0xff] %v332
        %419 = vst [vmem:[#allocation2 + $0x28] sm:$0xff] %v385
        %420 = vst [vmem:[#allocation2 + $0x30] sm:$0xff] %v335
        %421 = vst [vmem:[#allocation2 + $0x38] sm:$0xff] %v388
        %422 = vst [vmem:[#allocation2 + $0x40] sm:$0xff] %v338
        %423 = vst [vmem:[#allocation2 + $0x48] sm:$0xff] %v391
        %424 = vst [vmem:[#allocation2 + $0x50] sm:$0xff] %v341
        %425 = vst [vmem:[#allocation2 + $0x58] sm:$0xff] %v394
        %426 = vst [vmem:[#allocation2 + $0x60] sm:$0xff] %v344
        %427 = vst [vmem:[#allocation2 + $0x68] sm:$0xff] %v397
        %428 = vst [vmem:[#allocation2 + $0x70] sm:$0xff] %v347
        %429 = vst [vmem:[#allocation2 + $0x78] sm:$0xff] %v400
        %430 = vst [vmem:[#allocation2 + $0x80] sm:$0xff] %v350
        %431 = vst [vmem:[#allocation2 + $0x88] sm:$0xff] %v403
        %432 = vst [vmem:[#allocation2 + $0x90] sm:$0xff] %v353
        %433 = vst [vmem:[#allocation2 + $0x98] sm:$0xff] %v406
        %434 = vst [vmem:[#allocation2 + $0xa0] sm:$0xff] %v356
        %435 = vst [vmem:[#allocation2 + $0xa8] sm:$0xff] %v409
        %436 = vst [vmem:[#allocation2 + $0xb0] sm:$0xff] %v359
        %437 = vst [vmem:[#allocation2 + $0xb8] sm:$0xff] %v412
        loop: start=0, step=1, limit=4
        $region45: #{tpu_custom_call.1} parent=43 // loop_pre_header
          _
        $region46: #{tpu_custom_call.1} parent=43 // loop_header
          %s439 = sphi 0, %s443
          %p440 = scmp.ge.s32.totalorder %s439, 4
        $region47: #{tpu_custom_call.1} parent=43 // loop_header_branch
          %442 = sbr.rel (%p440) target = $region51
        $region48: #{tpu_custom_call.1} parent=43 // loop_body
          %s444 = smul.u32 %s439, 8
          %s445 = sadd.s32 %s444, 32
          %s446 = sadd.s32 %s444, 64
          %s447 = sshra.s32 %s444, 3
          %s448 = sand.u32 %s444, 7
          %s449 = smul.u32 %s447, 2
          %s450 = smul.addr %s449, 8
          %s451 = scalar_lea.vmem [#allocation2], %s450
          %v452 = vld [vmem:[%s451] sm:$0xff]
          %v453 = vld [vmem:[%s451 + $0x8] sm:$0xff]
          %s454 = sshra.s32 %s445, 3
          %s455 = sand.u32 %s445, 7
          %s456 = smul.u32 %s454, 2
          %s457 = smul.addr %s456, 8
          %s458 = scalar_lea.vmem [#allocation2], %s457
          %v459 = vld [vmem:[%s458] sm:$0xff]
          %v460 = vld [vmem:[%s458 + $0x8] sm:$0xff]
          %s461 = sshra.s32 %s446, 3
          %s462 = sand.u32 %s446, 7
          %s463 = smul.u32 %s461, 2
          %s464 = smul.addr %s463, 8
          %s465 = scalar_lea.vmem [#allocation2], %s464
          %v466 = vld [vmem:[%s465] sm:$0xff]
          %v467 = vld [vmem:[%s465 + $0x8] sm:$0xff]
          %v468 = vmul.f32 %v452, %v452
          %v469 = vmul.f32 %v453, %v453
          %v470 = vrot.slane %v468, 4
          %v471 = vadd.f32 %v468, %v470
          %v472 = vrot.slane %v471, 2
          %v473 = vadd.f32 %v471, %v472
          %v474 = vrot.slane %v473, 1
          %v475 = vadd.f32 %v473, %v474
          %v476 = vrot.slane %v469, 4
          %v477 = vadd.f32 %v469, %v476
          %v478 = vrot.slane %v477, 2
          %v479 = vadd.f32 %v477, %v478
          %v480 = vrot.slane %v479, 1
          %v481 = vadd.f32 %v479, %v480
          %v482 = vadd.f32 %v475, 1e-12
          %v483 = vadd.f32 %v481, 1e-12
          %v484 = vrsqrt.pop %v482
          %v485 = vmul.f32 %v484, %v482
          %v486 = vmul.f32 %v485, %v484
          %v487 = vmul.f32 0.5, %v486
          %v488 = vsub.f32 1.5, %v487
          %v489 = vmul.f32 %v484, %v488
          %vm490 = vweird.f32 %v482
          %vm491 = vweird.f32 %v484
          %vm492 = vmor %vm490, %vm491
          %v493 = vsel %vm492, %v484, %v489
          %v494 = vrsqrt.pop %v483
          %v495 = vmul.f32 %v494, %v483
          %v496 = vmul.f32 %v495, %v494
          %v497 = vmul.f32 0.5, %v496
          %v498 = vsub.f32 1.5, %v497
          %v499 = vmul.f32 %v494, %v498
          %vm500 = vweird.f32 %v483
          %vm501 = vweird.f32 %v494
          %vm502 = vmor %vm500, %vm501
          %v503 = vsel %vm502, %v494, %v499
          %v504 = vmul.f32 %v459, %v459
          %v505 = vmul.f32 %v460, %v460
          %v506 = vrot.slane %v504, 4
          %v507 = vadd.f32 %v504, %v506
          %v508 = vrot.slane %v507, 2
          %v509 = vadd.f32 %v507, %v508
          %v510 = vrot.slane %v509, 1
          %v511 = vadd.f32 %v509, %v510
          %v512 = vrot.slane %v505, 4
          %v513 = vadd.f32 %v505, %v512
          %v514 = vrot.slane %v513, 2
          %v515 = vadd.f32 %v513, %v514
          %v516 = vrot.slane %v515, 1
          %v517 = vadd.f32 %v515, %v516
          %v518 = vadd.f32 %v511, 1e-12
          %v519 = vadd.f32 %v517, 1e-12
          %v520 = vrsqrt.pop %v518
          %v521 = vmul.f32 %v520, %v518
          %v522 = vmul.f32 %v521, %v520
          %v523 = vmul.f32 0.5, %v522
          %v524 = vsub.f32 1.5, %v523
          %v525 = vmul.f32 %v520, %v524
          %vm526 = vweird.f32 %v518
          %vm527 = vweird.f32 %v520
          %vm528 = vmor %vm526, %vm527
          %v529 = vsel %vm528, %v520, %v525
          %v530 = vrsqrt.pop %v519
          %v531 = vmul.f32 %v530, %v519
          %v532 = vmul.f32 %v531, %v530
          %v533 = vmul.f32 0.5, %v532
          %v534 = vsub.f32 1.5, %v533
          %v535 = vmul.f32 %v530, %v534
          %vm536 = vweird.f32 %v519
          %vm537 = vweird.f32 %v530
          %vm538 = vmor %vm536, %vm537
          %v539 = vsel %vm538, %v530, %v535
          %v540 = vmul.f32 %v452, %v493
          %v541 = vmul.f32 %v453, %v503
          %v542 = vpack.c.bf16 %v540, %v540
          %v543 = vpack.c.bf16 %v541, %v541
          %v544 = vmul.f32 %v459, %v529
          %v545 = vmul.f32 %v460, %v539
          %v546 = vpack.c.bf16 %v544, %v544
          %v547 = vpack.c.bf16 %v545, %v545
          %548 = vxpose.binary.xlu0.c.b16.start [1/16] %v543, %v542, 128
          %549 = vxpose.binary.xlu0.c.b16.cont [2/16] 0, 0, 128
          %550 = vxpose.binary.xlu0.c.b16.cont [3/16] 0, 0, 128
          %551 = vxpose.binary.xlu0.c.b16.cont [4/16] 0, 0, 128
          %552 = vxpose.binary.xlu0.c.b16.cont [5/16] 0, 0, 128
          %553 = vxpose.binary.xlu0.c.b16.cont [6/16] 0, 0, 128
          %554 = vxpose.binary.xlu0.c.b16.cont [7/16] 0, 0, 128
          %555 = vxpose.binary.xlu0.c.b16.end [8/16] 0, 0, 128
          %v556 = vpop.trf.xlu0
          %v557 = vpop.trf.xlu0
          %v558 = vpop.trf.xlu0
          %v559 = vpop.trf.xlu0
          %v560 = vpop.trf.xlu0
          %v561 = vpop.trf.xlu0
          %v562 = vpop.trf.xlu0
          %v563 = vpop.trf.xlu0
          %v564 = vpop.trf.xlu0
          %v565 = vpop.trf.xlu0
          %v566 = vpop.trf.xlu0
          %v567 = vpop.trf.xlu0
          %v568 = vpop.trf.xlu0
          %v569 = vpop.trf.xlu0
          %v570 = vpop.trf.xlu0
          %v571 = vpop.trf.xlu0
          %vm572 = vcmask 64512
          %v574 = vsel %vm572, %v556, 0
          %v577 = vsel %vm572, %v558, 0
          %v580 = vsel %vm572, %v560, 0
          %v583 = vsel %vm572, %v562, 0
          %v586 = vsel %vm572, %v564, 0
          %v589 = vsel %vm572, %v566, 0
          %v592 = vsel %vm572, %v568, 0
          %v595 = vsel %vm572, %v570, 0
          %v598 = vsel %vm572, %v557, 0
          %v601 = vsel %vm572, %v559, 0
          %v604 = vsel %vm572, %v561, 0
          %v607 = vsel %vm572, %v563, 0
          %v610 = vsel %vm572, %v565, 0
          %v613 = vsel %vm572, %v567, 0
          %v616 = vsel %vm572, %v569, 0
          %v619 = vsel %vm572, %v571, 0
          %vm621 = vcmask 1043456
          %v623 = vsel %vm621, %v546, 0
          %v626 = vsel %vm621, %v547, 0
          %628 = vmatpush.bf16.msra.mxu0 0
          %629 = vmatpush.bf16.msra.mxu0 0
          %630 = vmatpush.bf16.msra.mxu0 0
          %631 = vmatpush.bf16.msra.mxu0 0
          %632 = vmatpush.bf16.msra.mxu0 0
          %633 = vmatpush.bf16.msra.mxu0 0
          %634 = vmatpush.bf16.msra.mxu0 0
          %635 = vmatpush.bf16.msra.mxu0 %v623
          %636 = vmatmul.bf16.gmra.mxu0 %v574
          %v637 = vpop.f32.mrf.mxu0
          %v638 = vadd.f32 0.0, %v637
          %v639 = vpop.f32.mrf.mxu0
          %v640 = vadd.f32 0.0, %v639
          %641 = vmatmul.bf16.gmra.mxu0 %v577
          %v642 = vpop.f32.mrf.mxu0
          %v643 = vadd.f32 0.0, %v642
          %v644 = vpop.f32.mrf.mxu0
          %v645 = vadd.f32 0.0, %v644
          %646 = vmatmul.bf16.gmra.mxu0 %v580
          %v647 = vpop.f32.mrf.mxu0
          %v648 = vadd.f32 0.0, %v647
          %v649 = vpop.f32.mrf.mxu0
          %v650 = vadd.f32 0.0, %v649
          %651 = vmatmul.bf16.gmra.mxu0 %v583
          %v652 = vpop.f32.mrf.mxu0
          %v653 = vadd.f32 0.0, %v652
          %v654 = vpop.f32.mrf.mxu0
          %v655 = vadd.f32 0.0, %v654
          %656 = vmatmul.bf16.gmra.mxu0 %v586
          %v657 = vpop.f32.mrf.mxu0
          %v658 = vadd.f32 0.0, %v657
          %v659 = vpop.f32.mrf.mxu0
          %v660 = vadd.f32 0.0, %v659
          %661 = vmatmul.bf16.gmra.mxu0 %v589
          %v662 = vpop.f32.mrf.mxu0
          %v663 = vadd.f32 0.0, %v662
          %v664 = vpop.f32.mrf.mxu0
          %v665 = vadd.f32 0.0, %v664
          %666 = vmatmul.bf16.gmra.mxu0 %v592
          %v667 = vpop.f32.mrf.mxu0
          %v668 = vadd.f32 0.0, %v667
          %v669 = vpop.f32.mrf.mxu0
          %v670 = vadd.f32 0.0, %v669
          %671 = vmatmul.bf16.gmra.mxu0 %v595
          %v672 = vpop.f32.mrf.mxu0
          %v673 = vadd.f32 0.0, %v672
          %v674 = vpop.f32.mrf.mxu0
          %v675 = vadd.f32 0.0, %v674
          %676 = vmatmul.bf16.gmra.mxu0 %v598
          %v677 = vpop.f32.mrf.mxu0
          %v678 = vadd.f32 0.0, %v677
          %v679 = vpop.f32.mrf.mxu0
          %v680 = vadd.f32 0.0, %v679
          %681 = vmatmul.bf16.gmra.mxu0 %v601
          %v682 = vpop.f32.mrf.mxu0
          %v683 = vadd.f32 0.0, %v682
          %v684 = vpop.f32.mrf.mxu0
          %v685 = vadd.f32 0.0, %v684
          %686 = vmatmul.bf16.gmra.mxu0 %v604
          %v687 = vpop.f32.mrf.mxu0
          %v688 = vadd.f32 0.0, %v687
          %v689 = vpop.f32.mrf.mxu0
          %v690 = vadd.f32 0.0, %v689
          %691 = vmatmul.bf16.gmra.mxu0 %v607
          %v692 = vpop.f32.mrf.mxu0
          %v693 = vadd.f32 0.0, %v692
          %v694 = vpop.f32.mrf.mxu0
          %v695 = vadd.f32 0.0, %v694
          %696 = vmatmul.bf16.gmra.mxu0 %v610
          %v697 = vpop.f32.mrf.mxu0
          %v698 = vadd.f32 0.0, %v697
          %v699 = vpop.f32.mrf.mxu0
          %v700 = vadd.f32 0.0, %v699
          %701 = vmatmul.bf16.gmra.mxu0 %v613
          %v702 = vpop.f32.mrf.mxu0
          %v703 = vadd.f32 0.0, %v702
          %v704 = vpop.f32.mrf.mxu0
          %v705 = vadd.f32 0.0, %v704
          %706 = vmatmul.bf16.gmra.mxu0 %v616
          %v707 = vpop.f32.mrf.mxu0
          %v708 = vadd.f32 0.0, %v707
          %v709 = vpop.f32.mrf.mxu0
          %v710 = vadd.f32 0.0, %v709
          %711 = vmatmul.bf16.gmra.mxu0 %v619
          %v712 = vpop.f32.mrf.mxu0
          %v713 = vadd.f32 0.0, %v712
          %v714 = vpop.f32.mrf.mxu0
          %v715 = vadd.f32 0.0, %v714
          %716 = vdwg.mxu0
          %717 = vmatpush.bf16.msra.mxu0 0
          %718 = vmatpush.bf16.msra.mxu0 0
          %719 = vmatpush.bf16.msra.mxu0 0
          %720 = vmatpush.bf16.msra.mxu0 0
          %721 = vmatpush.bf16.msra.mxu0 0
          %722 = vmatpush.bf16.msra.mxu0 0
          %723 = vmatpush.bf16.msra.mxu0 0
          %724 = vmatpush.bf16.msra.mxu0 %v626
          %725 = vmatmul.bf16.gmra.mxu0 %v574
          %v726 = vpop.f32.mrf.mxu0
          %v727 = vadd.f32 0.0, %v726
          %v728 = vpop.f32.mrf.mxu0
          %v729 = vadd.f32 0.0, %v728
          %730 = vmatmul.bf16.gmra.mxu0 %v577
          %v731 = vpop.f32.mrf.mxu0
          %v732 = vadd.f32 0.0, %v731
          %v733 = vpop.f32.mrf.mxu0
          %v734 = vadd.f32 0.0, %v733
          %735 = vmatmul.bf16.gmra.mxu0 %v580
          %v736 = vpop.f32.mrf.mxu0
          %v737 = vadd.f32 0.0, %v736
          %v738 = vpop.f32.mrf.mxu0
          %v739 = vadd.f32 0.0, %v738
          %740 = vmatmul.bf16.gmra.mxu0 %v583
          %v741 = vpop.f32.mrf.mxu0
          %v742 = vadd.f32 0.0, %v741
          %v743 = vpop.f32.mrf.mxu0
          %v744 = vadd.f32 0.0, %v743
          %745 = vmatmul.bf16.gmra.mxu0 %v586
          %v746 = vpop.f32.mrf.mxu0
          %v747 = vadd.f32 0.0, %v746
          %v748 = vpop.f32.mrf.mxu0
          %v749 = vadd.f32 0.0, %v748
          %750 = vmatmul.bf16.gmra.mxu0 %v589
          %v751 = vpop.f32.mrf.mxu0
          %v752 = vadd.f32 0.0, %v751
          %v753 = vpop.f32.mrf.mxu0
          %v754 = vadd.f32 0.0, %v753
          %755 = vmatmul.bf16.gmra.mxu0 %v592
          %v756 = vpop.f32.mrf.mxu0
          %v757 = vadd.f32 0.0, %v756
          %v758 = vpop.f32.mrf.mxu0
          %v759 = vadd.f32 0.0, %v758
          %760 = vmatmul.bf16.gmra.mxu0 %v595
          %v761 = vpop.f32.mrf.mxu0
          %v762 = vadd.f32 0.0, %v761
          %v763 = vpop.f32.mrf.mxu0
          %v764 = vadd.f32 0.0, %v763
          %765 = vmatmul.bf16.gmra.mxu0 %v598
          %v766 = vpop.f32.mrf.mxu0
          %v767 = vadd.f32 0.0, %v766
          %v768 = vpop.f32.mrf.mxu0
          %v769 = vadd.f32 0.0, %v768
          %770 = vmatmul.bf16.gmra.mxu0 %v601
          %v771 = vpop.f32.mrf.mxu0
          %v772 = vadd.f32 0.0, %v771
          %v773 = vpop.f32.mrf.mxu0
          %v774 = vadd.f32 0.0, %v773
          %775 = vmatmul.bf16.gmra.mxu0 %v604
          %v776 = vpop.f32.mrf.mxu0
          %v777 = vadd.f32 0.0, %v776
          %v778 = vpop.f32.mrf.mxu0
          %v779 = vadd.f32 0.0, %v778
          %780 = vmatmul.bf16.gmra.mxu0 %v607
          %v781 = vpop.f32.mrf.mxu0
          %v782 = vadd.f32 0.0, %v781
          %v783 = vpop.f32.mrf.mxu0
          %v784 = vadd.f32 0.0, %v783
          %785 = vmatmul.bf16.gmra.mxu0 %v610
          %v786 = vpop.f32.mrf.mxu0
          %v787 = vadd.f32 0.0, %v786
          %v788 = vpop.f32.mrf.mxu0
          %v789 = vadd.f32 0.0, %v788
          %790 = vmatmul.bf16.gmra.mxu0 %v613
          %v791 = vpop.f32.mrf.mxu0
          %v792 = vadd.f32 0.0, %v791
          %v793 = vpop.f32.mrf.mxu0
          %v794 = vadd.f32 0.0, %v793
          %795 = vmatmul.bf16.gmra.mxu0 %v616
          %v796 = vpop.f32.mrf.mxu0
          %v797 = vadd.f32 0.0, %v796
          %v798 = vpop.f32.mrf.mxu0
          %v799 = vadd.f32 0.0, %v798
          %800 = vmatmul.bf16.gmra.mxu0 %v619
          %v801 = vpop.f32.mrf.mxu0
          %v802 = vadd.f32 0.0, %v801
          %v803 = vpop.f32.mrf.mxu0
          %v804 = vadd.f32 0.0, %v803
          %805 = vdwg.mxu0
          %v806 = vmul.f32 %v638, 1.442695
          %v807 = vpow.pop %v806
          %v808 = vmul.f32 %v727, 1.442695
          %v809 = vpow.pop %v808
          %v810 = vmul.f32 %v640, 1.442695
          %v811 = vpow.pop %v810
          %v812 = vmul.f32 %v729, 1.442695
          %v813 = vpow.pop %v812
          %v814 = vmul.f32 %v643, 1.442695
          %v815 = vpow.pop %v814
          %v816 = vmul.f32 %v732, 1.442695
          %v817 = vpow.pop %v816
          %v818 = vmul.f32 %v645, 1.442695
          %v819 = vpow.pop %v818
          %v820 = vmul.f32 %v734, 1.442695
          %v821 = vpow.pop %v820
          %v822 = vmul.f32 %v648, 1.442695
          %v823 = vpow.pop %v822
          %v824 = vmul.f32 %v737, 1.442695
          %v825 = vpow.pop %v824
          %v826 = vmul.f32 %v650, 1.442695
          %v827 = vpow.pop %v826
          %v828 = vmul.f32 %v739, 1.442695
          %v829 = vpow.pop %v828
          %v830 = vmul.f32 %v653, 1.442695
          %v831 = vpow.pop %v830
          %v832 = vmul.f32 %v742, 1.442695
          %v833 = vpow.pop %v832
          %v834 = vmul.f32 %v655, 1.442695
          %v835 = vpow.pop %v834
          %v836 = vmul.f32 %v744, 1.442695
          %v837 = vpow.pop %v836
          %v838 = vmul.f32 %v658, 1.442695
          %v839 = vpow.pop %v838
          %v840 = vmul.f32 %v747, 1.442695
          %v841 = vpow.pop %v840
          %v842 = vmul.f32 %v660, 1.442695
          %v843 = vpow.pop %v842
          %v844 = vmul.f32 %v749, 1.442695
          %v845 = vpow.pop %v844
          %v846 = vmul.f32 %v663, 1.442695
          %v847 = vpow.pop %v846
          %v848 = vmul.f32 %v752, 1.442695
          %v849 = vpow.pop %v848
          %v850 = vmul.f32 %v665, 1.442695
          %v851 = vpow.pop %v850
          %v852 = vmul.f32 %v754, 1.442695
          %v853 = vpow.pop %v852
          %v854 = vmul.f32 %v668, 1.442695
          %v855 = vpow.pop %v854
          %v856 = vmul.f32 %v757, 1.442695
          %v857 = vpow.pop %v856
          %v858 = vmul.f32 %v670, 1.442695
          %v859 = vpow.pop %v858
          %v860 = vmul.f32 %v759, 1.442695
          %v861 = vpow.pop %v860
          %v862 = vmul.f32 %v673, 1.442695
          %v863 = vpow.pop %v862
          %v864 = vmul.f32 %v762, 1.442695
          %v865 = vpow.pop %v864
          %v866 = vmul.f32 %v675, 1.442695
          %v867 = vpow.pop %v866
          %v868 = vmul.f32 %v764, 1.442695
          %v869 = vpow.pop %v868
          %v870 = vmul.f32 %v678, 1.442695
          %v871 = vpow.pop %v870
          %v872 = vmul.f32 %v767, 1.442695
          %v873 = vpow.pop %v872
          %v874 = vmul.f32 %v680, 1.442695
          %v875 = vpow.pop %v874
          %v876 = vmul.f32 %v769, 1.442695
          %v877 = vpow.pop %v876
          %v878 = vmul.f32 %v683, 1.442695
          %v879 = vpow.pop %v878
          %v880 = vmul.f32 %v772, 1.442695
          %v881 = vpow.pop %v880
          %v882 = vmul.f32 %v685, 1.442695
          %v883 = vpow.pop %v882
          %v884 = vmul.f32 %v774, 1.442695
          %v885 = vpow.pop %v884
          %v886 = vmul.f32 %v688, 1.442695
          %v887 = vpow.pop %v886
          %v888 = vmul.f32 %v777, 1.442695
          %v889 = vpow.pop %v888
          %v890 = vmul.f32 %v690, 1.442695
          %v891 = vpow.pop %v890
          %v892 = vmul.f32 %v779, 1.442695
          %v893 = vpow.pop %v892
          %v894 = vmul.f32 %v693, 1.442695
          %v895 = vpow.pop %v894
          %v896 = vmul.f32 %v782, 1.442695
          %v897 = vpow.pop %v896
          %v898 = vmul.f32 %v695, 1.442695
          %v899 = vpow.pop %v898
          %v900 = vmul.f32 %v784, 1.442695
          %v901 = vpow.pop %v900
          %v902 = vmul.f32 %v698, 1.442695
          %v903 = vpow.pop %v902
          %v904 = vmul.f32 %v787, 1.442695
          %v905 = vpow.pop %v904
          %v906 = vmul.f32 %v700, 1.442695
          %v907 = vpow.pop %v906
          %v908 = vmul.f32 %v789, 1.442695
          %v909 = vpow.pop %v908
          %v910 = vmul.f32 %v703, 1.442695
          %v911 = vpow.pop %v910
          %v912 = vmul.f32 %v792, 1.442695
          %v913 = vpow.pop %v912
          %v914 = vmul.f32 %v705, 1.442695
          %v915 = vpow.pop %v914
          %v916 = vmul.f32 %v794, 1.442695
          %v917 = vpow.pop %v916
          %v918 = vmul.f32 %v708, 1.442695
          %v919 = vpow.pop %v918
          %v920 = vmul.f32 %v797, 1.442695
          %v921 = vpow.pop %v920
          %v922 = vmul.f32 %v710, 1.442695
          %v923 = vpow.pop %v922
          %v924 = vmul.f32 %v799, 1.442695
          %v925 = vpow.pop %v924
          %v926 = vmul.f32 %v713, 1.442695
          %v927 = vpow.pop %v926
          %v928 = vmul.f32 %v802, 1.442695
          %v929 = vpow.pop %v928
          %v930 = vmul.f32 %v715, 1.442695
          %v931 = vpow.pop %v930
          %v932 = vmul.f32 %v804, 1.442695
          %v933 = vpow.pop %v932
          %v934 = vpack.c.bf16 %v811, %v807
          %v935 = vpack.c.bf16 %v813, %v809
          %v936 = vpack.c.bf16 %v819, %v815
          %v937 = vpack.c.bf16 %v821, %v817
          %v938 = vpack.c.bf16 %v827, %v823
          %v939 = vpack.c.bf16 %v829, %v825
          %v940 = vpack.c.bf16 %v835, %v831
          %v941 = vpack.c.bf16 %v837, %v833
          %v942 = vpack.c.bf16 %v843, %v839
          %v943 = vpack.c.bf16 %v845, %v841
          %v944 = vpack.c.bf16 %v851, %v847
          %v945 = vpack.c.bf16 %v853, %v849
          %v946 = vpack.c.bf16 %v859, %v855
          %v947 = vpack.c.bf16 %v861, %v857
          %v948 = vpack.c.bf16 %v867, %v863
          %v949 = vpack.c.bf16 %v869, %v865
          %v950 = vpack.c.bf16 %v875, %v871
          %v951 = vpack.c.bf16 %v877, %v873
          %v952 = vpack.c.bf16 %v883, %v879
          %v953 = vpack.c.bf16 %v885, %v881
          %v954 = vpack.c.bf16 %v891, %v887
          %v955 = vpack.c.bf16 %v893, %v889
          %v956 = vpack.c.bf16 %v899, %v895
          %v957 = vpack.c.bf16 %v901, %v897
          %v958 = vpack.c.bf16 %v907, %v903
          %v959 = vpack.c.bf16 %v909, %v905
          %v960 = vpack.c.bf16 %v915, %v911
          %v961 = vpack.c.bf16 %v917, %v913
          %v962 = vpack.c.bf16 %v923, %v919
          %v963 = vpack.c.bf16 %v925, %v921
          %v964 = vpack.c.bf16 %v931, %v927
          %v965 = vpack.c.bf16 %v933, %v929
          %v966 = vpack.c.bf16 1.0, %v466
          %v967 = vpack.c.bf16 1.0, %v467
          %968 = vmatpush.bf16.xpose.msra.mxu0 %v948
          %969 = vmatpush.bf16.xpose.msra.mxu0 %v946
          %970 = vmatpush.bf16.xpose.msra.mxu0 %v944
          %971 = vmatpush.bf16.xpose.msra.mxu0 %v942
          %972 = vmatpush.bf16.xpose.msra.mxu0 %v940
          %973 = vmatpush.bf16.xpose.msra.mxu0 %v938
          %974 = vmatpush.bf16.xpose.msra.mxu0 %v936
          %975 = vmatpush.bf16.xpose.msra.mxu0 %v934
          %976 = vmatmul.bf16.gmra.mxu0 %v966
          %v977 = vpop.f32.mrf.mxu0
          %v978 = vadd.f32 0.0, %v977
          %v979 = vpop.f32.mrf.mxu0
          %v980 = vadd.f32 0.0, %v979
          %981 = vdwg.mxu0
          %982 = vmatpush.bf16.xpose.msra.mxu0 %v949
          %983 = vmatpush.bf16.xpose.msra.mxu0 %v947
          %984 = vmatpush.bf16.xpose.msra.mxu0 %v945
          %985 = vmatpush.bf16.xpose.msra.mxu0 %v943
          %986 = vmatpush.bf16.xpose.msra.mxu0 %v941
          %987 = vmatpush.bf16.xpose.msra.mxu0 %v939
          %988 = vmatpush.bf16.xpose.msra.mxu0 %v937
          %989 = vmatpush.bf16.xpose.msra.mxu0 %v935
          %990 = vmatmul.bf16.gmra.mxu0 %v967
          %v991 = vpop.f32.mrf.mxu0
          %v992 = vadd.f32 %v978, %v991
          %v993 = vpop.f32.mrf.mxu0
          %v994 = vadd.f32 %v980, %v993
          %995 = vdwg.mxu0
          %996 = vmatpush.bf16.xpose.msra.mxu0 %v964
          %997 = vmatpush.bf16.xpose.msra.mxu0 %v962
          %998 = vmatpush.bf16.xpose.msra.mxu0 %v960
          %999 = vmatpush.bf16.xpose.msra.mxu0 %v958
          %1000 = vmatpush.bf16.xpose.msra.mxu0 %v956
          %1001 = vmatpush.bf16.xpose.msra.mxu0 %v954
          %1002 = vmatpush.bf16.xpose.msra.mxu0 %v952
          %1003 = vmatpush.bf16.xpose.msra.mxu0 %v950
          %1004 = vmatmul.bf16.gmra.mxu0 %v966
          %v1005 = vpop.f32.mrf.mxu0
          %v1006 = vadd.f32 0.0, %v1005
          %v1007 = vpop.f32.mrf.mxu0
          %v1008 = vadd.f32 0.0, %v1007
          %1009 = vdwg.mxu0
          %1010 = vmatpush.bf16.xpose.msra.mxu0 %v965
          %1011 = vmatpush.bf16.xpose.msra.mxu0 %v963
          %1012 = vmatpush.bf16.xpose.msra.mxu0 %v961
          %1013 = vmatpush.bf16.xpose.msra.mxu0 %v959
          %1014 = vmatpush.bf16.xpose.msra.mxu0 %v957
          %1015 = vmatpush.bf16.xpose.msra.mxu0 %v955
          %1016 = vmatpush.bf16.xpose.msra.mxu0 %v953
          %1017 = vmatpush.bf16.xpose.msra.mxu0 %v951
          %1018 = vmatmul.bf16.gmra.mxu0 %v967
          %v1019 = vpop.f32.mrf.mxu0
          %v1020 = vadd.f32 %v1006, %v1019
          %v1021 = vpop.f32.mrf.mxu0
          %v1022 = vadd.f32 %v1008, %v1021
          %1023 = vdwg.mxu0
          %v1024 = vrcp.pop %v994
          %v1025 = vrcp.pop %v1022
          %v1026 = vperm.slane %v1024, 0
          %v1027 = vperm.slane %v1025, 0
          %v1028 = vmul.f32 %v992, %v1026
          %v1029 = vmul.f32 %v1020, %v1027
          %s1030 = smul.addr %s449, 8
          %s1031 = scalar_lea.vmem [#allocation3], %s1030
          %1032 = vst [vmem:[%s1031] sm:$0xff] %v1028
          %1033 = vst [vmem:[%s1031 + $0x8] sm:$0xff] %v1029
        $region49: #{tpu_custom_call.1} parent=43 // loop_footer
          %s443 = sadd.s32 1, %s439
        $region50: #{tpu_custom_call.1} parent=43 // loop_footer_branch
          %438 = sbr.rel target = $region46
        $region51: #{tpu_custom_call.1} parent=43 // loop_exit
          _
        %v1034 = vld [vmem:[%s2] sm:$0xff]
        %v1035 = vld [vmem:[%s2 + $0x8] sm:$0xff]
        %v1036 = vld [vmem:[%s2 + $0x10] sm:$0xff]
        %v1037 = vld [vmem:[%s2 + $0x18] sm:$0xff]
        %v1038 = vld [vmem:[#allocation3] sm:$0xff]
        %v1039 = vld [vmem:[#allocation3 + $0x8] sm:$0xff]
        %v1040 = vld [vmem:[#allocation3 + $0x10] sm:$0xff]
        %v1041 = vld [vmem:[#allocation3 + $0x18] sm:$0xff]
        %v1042 = vld [vmem:[#allocation3 + $0x20] sm:$0xff]
        %v1043 = vld [vmem:[#allocation3 + $0x28] sm:$0xff]
        %v1044 = vld [vmem:[#allocation3 + $0x30] sm:$0xff]
        %v1045 = vld [vmem:[#allocation3 + $0x38] sm:$0xff]
        %v1046 = vld [vmem:[%s3] sm:$0xff]
        %v1047 = vld [vmem:[%s3 + $0x8] sm:$0xff]
        %v1048 = vld [vmem:[%s3 + $0x10] sm:$0xff]
        %v1049 = vld [vmem:[%s3 + $0x18] sm:$0xff]
        %1051 = vset.pattern.permute.xlu0 0
        %1052 = vperm.xlu0 %1051, %v1046
        %v1053 = vpop.permute.xlu0 %1052
        %1056 = vset.pattern.permute.xlu0 0
        %1057 = vperm.xlu0 %1056, %v1047
        %v1058 = vpop.permute.xlu0 %1057
        %1061 = vset.pattern.permute.xlu0 0
        %1062 = vperm.xlu0 %1061, %v1048
        %v1063 = vpop.permute.xlu0 %1062
        %1066 = vset.pattern.permute.xlu0 0
        %1067 = vperm.xlu0 %1066, %v1049
        %v1068 = vpop.permute.xlu0 %1067
        %v1071 = vsel %vm271, %v1034, 0
        %v1074 = vsel %vm271, %v1035, 0
        %v1077 = vsel %vm271, %v1036, 0
        %v1080 = vsel %vm271, %v1037, 0
        %1082 = vmatpush.msra.mxu0 0.0
        %1083 = vmatpush.msra.mxu0 0.0
        %1084 = vmatpush.msra.mxu0 0.0
        %1085 = vmatpush.msra.mxu0 0.0
        %1086 = vmatpush.msra.mxu0 0.0
        %1087 = vmatpush.msra.mxu0 0.0
        %1088 = vmatpush.msra.mxu0 0.0
        %1089 = vmatpush.msra.mxu0 0.0
        %1090 = vmatpush.msra.mxu0 0.0
        %1091 = vmatpush.msra.mxu0 0.0
        %1092 = vmatpush.msra.mxu0 0.0
        %1093 = vmatpush.msra.mxu0 0.0
        %1094 = vmatpush.msra.mxu0 %v1044
        %1095 = vmatpush.msra.mxu0 %v1042
        %1096 = vmatpush.msra.mxu0 %v1040
        %1097 = vmatpush.msra.mxu0 %v1038
        %1098 = vmatmul.f32.gmra.mxu0 %v1071
        %v1099 = vpop.f32.mrf.mxu0
        %v1100 = vadd.f32 %v1053, %v1099
        %1101 = vmatmul.f32.gmra.mxu0 %v1074
        %v1102 = vpop.f32.mrf.mxu0
        %v1103 = vadd.f32 %v1058, %v1102
        %1104 = vmatmul.f32.gmra.mxu0 %v1077
        %v1105 = vpop.f32.mrf.mxu0
        %v1106 = vadd.f32 %v1063, %v1105
        %1107 = vmatmul.f32.gmra.mxu0 %v1080
        %v1108 = vpop.f32.mrf.mxu0
        %v1109 = vadd.f32 %v1068, %v1108
        %1110 = vdwg.mxu0
        %1111 = vmatpush.msra.mxu0 0.0
        %1112 = vmatpush.msra.mxu0 0.0
        %1113 = vmatpush.msra.mxu0 0.0
        %1114 = vmatpush.msra.mxu0 0.0
        %1115 = vmatpush.msra.mxu0 0.0
        %1116 = vmatpush.msra.mxu0 0.0
        %1117 = vmatpush.msra.mxu0 0.0
        %1118 = vmatpush.msra.mxu0 0.0
        %1119 = vmatpush.msra.mxu0 0.0
        %1120 = vmatpush.msra.mxu0 0.0
        %1121 = vmatpush.msra.mxu0 0.0
        %1122 = vmatpush.msra.mxu0 0.0
        %1123 = vmatpush.msra.mxu0 %v1045
        %1124 = vmatpush.msra.mxu0 %v1043
        %1125 = vmatpush.msra.mxu0 %v1041
        %1126 = vmatpush.msra.mxu0 %v1039
        %1127 = vmatmul.f32.gmra.mxu0 %v1071
        %v1128 = vpop.f32.mrf.mxu0
        %v1129 = vadd.f32 %v1053, %v1128
        %1130 = vmatmul.f32.gmra.mxu0 %v1074
        %v1131 = vpop.f32.mrf.mxu0
        %v1132 = vadd.f32 %v1058, %v1131
        %1133 = vmatmul.f32.gmra.mxu0 %v1077
        %v1134 = vpop.f32.mrf.mxu0
        %v1135 = vadd.f32 %v1063, %v1134
        %1136 = vmatmul.f32.gmra.mxu0 %v1080
        %v1137 = vpop.f32.mrf.mxu0
        %v1138 = vadd.f32 %v1068, %v1137
        %1139 = vdwg.mxu0
        %v1140 = vadd.f32 %v251, %v1100
        %v1141 = vadd.f32 %v252, %v1129
        %v1142 = vadd.f32 %v253, %v1103
        %v1143 = vadd.f32 %v254, %v1132
        %v1144 = vadd.f32 %v255, %v1106
        %v1145 = vadd.f32 %v256, %v1135
        %v1146 = vadd.f32 %v257, %v1109
        %v1147 = vadd.f32 %v258, %v1138
        %v1148 = vadd.f32 %v1140, %v1142
        %v1149 = vadd.f32 %v1148, %v1144
        %v1150 = vadd.f32 %v1149, %v1146
        %v1151 = vrot.slane %v1150, 4
        %v1152 = vadd.f32 %v1150, %v1151
        %v1153 = vrot.slane %v1152, 2
        %v1154 = vadd.f32 %v1152, %v1153
        %v1155 = vrot.slane %v1154, 1
        %v1156 = vadd.f32 %v1154, %v1155
        %v1157 = vadd.f32 %v1141, %v1143
        %v1158 = vadd.f32 %v1157, %v1145
        %v1159 = vadd.f32 %v1158, %v1147
        %v1160 = vrot.slane %v1159, 4
        %v1161 = vadd.f32 %v1159, %v1160
        %v1162 = vrot.slane %v1161, 2
        %v1163 = vadd.f32 %v1161, %v1162
        %v1164 = vrot.slane %v1163, 1
        %v1165 = vadd.f32 %v1163, %v1164
        %v1166 = vrcp.pop 32.0
        %v1167 = vmul.f32 32.0, %v1166
        %v1168 = vsub.f32 1.0, %v1167
        %v1169 = vmul.f32 %v1166, %v1168
        %v1170 = vadd.f32 %v1166, %v1169
        %vm1171 = vweird.f32 %v1166
        %v1172 = vsel %vm1171, %v1166, %v1170
        %v1173 = vmul.f32 %v1156, %v1172
        %v1174 = vmul.f32 %v1165, %v1172
        %v1175 = vsub.f32 %v1140, %v1173
        %v1176 = vsub.f32 %v1141, %v1174
        %v1177 = vsub.f32 %v1142, %v1173
        %v1178 = vsub.f32 %v1143, %v1174
        %v1179 = vsub.f32 %v1144, %v1173
        %v1180 = vsub.f32 %v1145, %v1174
        %v1181 = vsub.f32 %v1146, %v1173
        %v1182 = vsub.f32 %v1147, %v1174
        %v1183 = vmul.f32 %v1175, %v1175
        %v1184 = vmul.f32 %v1176, %v1176
        %v1185 = vmul.f32 %v1177, %v1177
        %v1186 = vmul.f32 %v1178, %v1178
        %v1187 = vmul.f32 %v1179, %v1179
        %v1188 = vmul.f32 %v1180, %v1180
        %v1189 = vmul.f32 %v1181, %v1181
        %v1190 = vmul.f32 %v1182, %v1182
        %v1191 = vadd.f32 %v1183, %v1185
        %v1192 = vadd.f32 %v1191, %v1187
        %v1193 = vadd.f32 %v1192, %v1189
        %v1194 = vrot.slane %v1193, 4
        %v1195 = vadd.f32 %v1193, %v1194
        %v1196 = vrot.slane %v1195, 2
        %v1197 = vadd.f32 %v1195, %v1196
        %v1198 = vrot.slane %v1197, 1
        %v1199 = vadd.f32 %v1197, %v1198
        %v1200 = vadd.f32 %v1184, %v1186
        %v1201 = vadd.f32 %v1200, %v1188
        %v1202 = vadd.f32 %v1201, %v1190
        %v1203 = vrot.slane %v1202, 4
        %v1204 = vadd.f32 %v1202, %v1203
        %v1205 = vrot.slane %v1204, 2
        %v1206 = vadd.f32 %v1204, %v1205
        %v1207 = vrot.slane %v1206, 1
        %v1208 = vadd.f32 %v1206, %v1207
        %v1209 = vrcp.pop 31.0
        %v1210 = vmul.f32 31.0, %v1209
        %v1211 = vsub.f32 1.0, %v1210
        %v1212 = vmul.f32 %v1209, %v1211
        %v1213 = vadd.f32 %v1209, %v1212
        %vm1214 = vweird.f32 %v1209
        %v1215 = vsel %vm1214, %v1209, %v1213
        %v1216 = vmul.f32 %v1199, %v1215
        %v1217 = vmul.f32 %v1208, %v1215
        %v1218 = vrsqrt.pop %v1216
        %v1219 = vmul.f32 %v1218, %v1216
        %v1220 = vmul.f32 %v1219, %v1218
        %v1221 = vmul.f32 0.5, %v1220
        %v1222 = vsub.f32 1.5, %v1221
        %v1223 = vmul.f32 %v1218, %v1222
        %v1224 = vmul.f32 %v1216, %v1223
        %vm1225 = vcmp.eq.f32.partialorder %v1216, inf
        %v1226 = vsel %vm1225, %v1216, %v1224
        %vm1227 = vcmp.eq.f32.partialorder %v1216, 0.0
        %v1228 = vand.u32 %v1216, 2147483648
        %v1229 = vsel %vm1227, %v1228, %v1226
        %v1230 = vrsqrt.pop %v1217
        %v1231 = vmul.f32 %v1230, %v1217
        %v1232 = vmul.f32 %v1231, %v1230
        %v1233 = vmul.f32 0.5, %v1232
        %v1234 = vsub.f32 1.5, %v1233
        %v1235 = vmul.f32 %v1230, %v1234
        %v1236 = vmul.f32 %v1217, %v1235
        %vm1237 = vcmp.eq.f32.partialorder %v1217, inf
        %v1238 = vsel %vm1237, %v1217, %v1236
        %vm1239 = vcmp.eq.f32.partialorder %v1217, 0.0
        %v1240 = vand.u32 %v1217, 2147483648
        %v1241 = vsel %vm1239, %v1240, %v1238
        %v1242 = vadd.f32 %v1229, 1e-06
        %v1243 = vadd.f32 %v1241, 1e-06
        %v1244 = vrcp.pop %v1242
        %v1245 = vmul.f32 %v1242, %v1244
        %v1246 = vsub.f32 1.0, %v1245
        %v1247 = vmul.f32 %v1244, %v1246
        %v1248 = vadd.f32 %v1244, %v1247
        %vm1249 = vweird.f32 %v1242
        %vm1250 = vweird.f32 %v1244
        %vm1251 = vmor %vm1249, %vm1250
        %v1252 = vsel %vm1251, %v1244, %v1248
        %v1253 = vand.u32 2147483647, %v1242
        %vm1254 = vcmp.eq.f32.partialorder %v1253, 8.507059e+37
        %v1255 = vand.u32 %v1242, 2147483648
        %v1256 = vor.u32 1.1754944e-38, %v1255
        %v1257 = vsel %vm1254, %v1256, %v1252
        %v1258 = vmul.f32 %v1175, %v1257
        %v1259 = vrcp.pop %v1243
        %v1260 = vmul.f32 %v1243, %v1259
        %v1261 = vsub.f32 1.0, %v1260
        %v1262 = vmul.f32 %v1259, %v1261
        %v1263 = vadd.f32 %v1259, %v1262
        %vm1264 = vweird.f32 %v1243
        %vm1265 = vweird.f32 %v1259
        %vm1266 = vmor %vm1264, %vm1265
        %v1267 = vsel %vm1266, %v1259, %v1263
        %v1268 = vand.u32 2147483647, %v1243
        %vm1269 = vcmp.eq.f32.partialorder %v1268, 8.507059e+37
        %v1270 = vand.u32 %v1243, 2147483648
        %v1271 = vor.u32 1.1754944e-38, %v1270
        %v1272 = vsel %vm1269, %v1271, %v1267
        %v1273 = vmul.f32 %v1176, %v1272
        %v1274 = vmul.f32 %v1177, %v1257
        %v1275 = vmul.f32 %v1178, %v1272
        %v1276 = vmul.f32 %v1179, %v1257
        %v1277 = vmul.f32 %v1180, %v1272
        %v1278 = vmul.f32 %v1181, %v1257
        %v1279 = vmul.f32 %v1182, %v1272
        %v1280 = vld [vmem:[%s4] sm:$0xff]
        %v1281 = vld [vmem:[%s4 + $0x8] sm:$0xff]
        %v1282 = vld [vmem:[%s4 + $0x10] sm:$0xff]
        %v1283 = vld [vmem:[%s4 + $0x18] sm:$0xff]
        %1285 = vset.pattern.permute.xlu0 0
        %1286 = vperm.xlu0 %1285, %v1280
        %v1287 = vpop.permute.xlu0 %1286
        %1290 = vset.pattern.permute.xlu0 0
        %1291 = vperm.xlu0 %1290, %v1281
        %v1292 = vpop.permute.xlu0 %1291
        %1295 = vset.pattern.permute.xlu0 0
        %1296 = vperm.xlu0 %1295, %v1282
        %v1297 = vpop.permute.xlu0 %1296
        %1300 = vset.pattern.permute.xlu0 0
        %1301 = vperm.xlu0 %1300, %v1283
        %v1302 = vpop.permute.xlu0 %1301
        %v1304 = vmul.f32 %v1287, %v1258
        %v1305 = vmul.f32 %v1287, %v1273
        %v1306 = vmul.f32 %v1292, %v1274
        %v1307 = vmul.f32 %v1292, %v1275
        %v1308 = vmul.f32 %v1297, %v1276
        %v1309 = vmul.f32 %v1297, %v1277
        %v1310 = vmul.f32 %v1302, %v1278
        %v1311 = vmul.f32 %v1302, %v1279
        %v1312 = vld [vmem:[%s5] sm:$0xff]
        %v1313 = vld [vmem:[%s5 + $0x8] sm:$0xff]
        %v1314 = vld [vmem:[%s5 + $0x10] sm:$0xff]
        %v1315 = vld [vmem:[%s5 + $0x18] sm:$0xff]
        %1317 = vset.pattern.permute.xlu0 0
        %1318 = vperm.xlu0 %1317, %v1312
        %v1319 = vpop.permute.xlu0 %1318
        %1322 = vset.pattern.permute.xlu0 0
        %1323 = vperm.xlu0 %1322, %v1313
        %v1324 = vpop.permute.xlu0 %1323
        %1327 = vset.pattern.permute.xlu0 0
        %1328 = vperm.xlu0 %1327, %v1314
        %v1329 = vpop.permute.xlu0 %1328
        %1332 = vset.pattern.permute.xlu0 0
        %1333 = vperm.xlu0 %1332, %v1315
        %v1334 = vpop.permute.xlu0 %1333
        %v1336 = vadd.f32 %v1304, %v1319
        %v1337 = vadd.f32 %v1305, %v1319
        %v1338 = vadd.f32 %v1306, %v1324
        %v1339 = vadd.f32 %v1307, %v1324
        %v1340 = vadd.f32 %v1308, %v1329
        %v1341 = vadd.f32 %v1309, %v1329
        %v1342 = vadd.f32 %v1310, %v1334
        %v1343 = vadd.f32 %v1311, %v1334
        %1344 = vst [vmem:[%s244] sm:$0xff] %v1336
        %1345 = vst [vmem:[%s244 + $0x8] sm:$0xff] %v1337
        %1346 = vst [vmem:[%s244 + $0x10] sm:$0xff] %v1338
        %1347 = vst [vmem:[%s244 + $0x18] sm:$0xff] %v1339
        %1348 = vst [vmem:[%s244 + $0x20] sm:$0xff] %v1340
        %1349 = vst [vmem:[%s244 + $0x28] sm:$0xff] %v1341
        %1350 = vst [vmem:[%s244 + $0x30] sm:$0xff] %v1342
        %1351 = vst [vmem:[%s244 + $0x38] sm:$0xff] %v1343
        %s1352 = sand.u32 %s159, 1
        %s1353 = scalar_lea.sflag [#allocation5], %s1352
        %s1354 = sand.u32 %s159, 1
        %s1355 = smul.addr %s1354, 64
        %s1356 = scalar_lea.vmem [#allocation4], %s1355
        // Predicated region
        $region52: #{tpu_custom_call.1} parent=43 // pred_check
          %p1357 = pneg %p169
        $region53: #{tpu_custom_call.1} parent=43 // pred_check_branch
          %1359 = sbr.rel (%p1357) target = $region55
        $region54: #{tpu_custom_call.1} parent=43 // pred_region
          %1361 = vsyncadd %s1353, 0
          %s1362 = smul.addr %s20, 8
          %s1363 = smul.addr %s1362, 8
          %s1364 = scalar_lea.hbm %s6, %s1363
          %s1365 = sshll.u32 %s1356, 4
          %s1366 = int_to_ptr.vmem [resolvable:$true] %s1365
          %s1367 = sshll.u32 %s1364, 4
          %s1368 = int_to_ptr.hbm [resolvable:$true] %s1367
          %1373 = dma.vmem_to_hbm [thread:$0]  %s1366, 1024, %s1368, %s1353, 256, 256, 16
        $region55: #{tpu_custom_call.1} parent=43 // pred_fallthru
          _
      $region44: #{tpu_custom_call.1} parent=5 // pred_fallthru
        _
      %p1374 = scmp.le.s32.totalorder 2, %s15
      // Predicated region
      $region56: #{tpu_custom_call.1} parent=5 // pred_check
        %p1375 = pneg %p1374
      $region57: #{tpu_custom_call.1} parent=5 // pred_check_branch
        %1377 = sbr.rel (%p1375) target = $region59
      $region58: #{tpu_custom_call.1} parent=5 // pred_region
        %s1378 = ssub.s32 %s15, 2
        // Predicated region
        $region60: #{tpu_custom_call.1} parent=58 // pred_check
          %p1379 = pneg %p175
        $region61: #{tpu_custom_call.1} parent=58 // pred_check_branch
          %1381 = sbr.rel (%p1379) target = $region63
        $region62: #{tpu_custom_call.1} parent=58 // pred_region
          %s1382 = sand.u32 %s160, 1
          %s1383 = scalar_lea.sflag [#allocation5], %s1382
          %s1384 = sand.u32 %s160, 1
          %s1385 = smul.addr %s1384, 64
          %s1386 = scalar_lea.vmem [#allocation4], %s1385
          %1388 = dma.done %s1383, 1024
        $region63: #{tpu_custom_call.1} parent=58 // pred_fallthru
          _
      $region59: #{tpu_custom_call.1} parent=5 // pred_fallthru
        _
    $region6: #{tpu_custom_call.1} parent=1 // loop_footer
      %s19 = sadd.s32 1, %s15
    $region7: #{tpu_custom_call.1} parent=1 // loop_footer_branch
      %14 = sbr.rel target = $region3
    $region8: #{tpu_custom_call.1} parent=1 // loop_exit
      _
    %1389 = vsyncpa [#allocation5], 1
    %s1390 = scalar_lea.sflag [#allocation5], 1
    %1391 = vsyncpa %s1390, 1

</llo_original>
